<compile_context>
chip_gen: v7x
topology: tpu7x:2x2x1
jax: 0.10.0
libtpu: 0.0.40
codegen_flags: <defaults>
</compile_context>

<pallas_src>
import jax
import jax.numpy as jnp
from jax.experimental import pallas as pl
from jax.experimental.pallas import tpu as pltpu


def _round_up(x, m):
    return ((x + m - 1) // m) * m


_H1, _H2, _H3 = 256, 256, 128                 # padded hidden widths
_VMEM_LIMIT_BYTES = 48 * 1024 * 1024          # safe on v5e/v6e (128 MiB) and v7x (64 MiB)
_TILE_VMEM_BUDGET = 32 * 1024 * 1024          # budget for the pipelined batch tiles

# Whether pipeline_mode=pl.Buffered(1) (single-buffered resident weights) is
# usable on this JAX/Mosaic build.  Falls back automatically on first failure.
_SINGLE_BUFFER_WEIGHTS = hasattr(pl, "Buffered")


# ---------------------------------------------------------------------------
# Kernel: one batch tile per grid step, all weights resident in VMEM.
# The -inf mask is pre-folded into (w4, b4), so the body is just 4 MXU matmuls
# with f32 accumulation and f32 bias/ReLU epilogues (v5e-safe).
# ---------------------------------------------------------------------------
def dqn_kernel(x_ref,
               w1_ref, b1_ref,
               w2_ref, b2_ref,
               w3_ref, b3_ref,
               w4_ref, b4_ref,
               out_ref):
    f32 = jnp.float32
    bf16 = jnp.bfloat16

    # Fused [fc_state | fc_workload | fc_global] block-diagonal matmul + ReLU.
    h = jnp.dot(x_ref[...], w1_ref[...], preferred_element_type=f32) + b1_ref[...]
    h = jnp.maximum(h, 0.0).astype(bf16)

    # fc_combined + ReLU
    h = jnp.dot(h, w2_ref[...], preferred_element_type=f32) + b2_ref[...]
    h = jnp.maximum(h, 0.0).astype(bf16)

    # fc2 + ReLU
    h = jnp.dot(h, w3_ref[...], preferred_element_type=f32) + b3_ref[...]
    h = jnp.maximum(h, 0.0).astype(bf16)

    # fc3 (masked columns: zeroed w4 column + (-inf) f32 bias -> -inf output).
    out_ref[...] = jnp.dot(h, w4_ref[...], preferred_element_type=f32) + b4_ref[...]


# ---------------------------------------------------------------------------
# Parameter init (PyTorch nn.Linear style), stored as (out_features, in_features)
# ---------------------------------------------------------------------------
def init_linear_params(key, in_features, out_features):
    kw, kb = jax.random.split(key)
    bound = 1.0 / jnp.sqrt(jnp.float32(in_features))
    w = jax.random.uniform(kw, (out_features, in_features), jnp.float32, -bound, bound)
    b = jax.random.uniform(kb, (out_features,), jnp.float32, -bound, bound)
    return w, b


def make_dqn_params(key, max_employees, max_tasks):
    keys = jax.random.split(key, 6)
    p = {}
    p["fc_state"] = init_linear_params(keys[0], max_tasks * 5, 128)
    p["fc_workload"] = init_linear_params(keys[1], max_employees, 64)
    p["fc_global"] = init_linear_params(keys[2], 3, 16)
    p["fc_combined"] = init_linear_params(keys[3], 128 + 64 + 16, 256)
    p["fc2"] = init_linear_params(keys[4], 256, 128)
    p["fc3"] = init_linear_params(keys[5], 128, 2 * max_tasks * max_employees)
    return p


# ---------------------------------------------------------------------------
# One-time packing: block-diagonal fusion, padding, bf16 casts, mask folding.
# Call once; reuse the result across every dqn_forward call.
# ---------------------------------------------------------------------------
def pack_dqn_params(params, *, max_employees, max_tasks, num_employees, num_tasks):
    f32, bf16 = jnp.float32, jnp.bfloat16

    state_dim = max_tasks * 5
    work_dim = max_employees
    glob_dim = 3
    k_raw = state_dim + work_dim + glob_dim
    K1 = _round_up(k_raw, 128)
    out_dim = 2 * max_tasks * max_employees
    out_pad = _round_up(out_dim, 128)            # lane-dense output stores

    # --- block-diagonal W1 (fc_state | fc_workload | fc_global) --------------
    ws, bs = params["fc_state"]        # (128, state_dim)
    ww, bw = params["fc_workload"]     # (64,  work_dim)
    wg, bg = params["fc_global"]       # (16,  3)

    w1 = jnp.zeros((K1, _H1), f32)
    w1 = w1.at[:state_dim, 0:128].set(ws.T)
    w1 = w1.at[state_dim:state_dim + work_dim, 128:192].set(ww.T)
    w1 = w1.at[state_dim + work_dim:k_raw, 192:208].set(wg.T)
    b1 = jnp.zeros((1, _H1), f32)
    b1 = b1.at[0, 0:128].set(bs)
    b1 = b1.at[0, 128:192].set(bw)
    b1 = b1.at[0, 192:208].set(bg)

    # --- fc_combined, padded to 256 input rows (extra rows multiply zeros) ---
    wc, bc = params["fc_combined"]     # (256, 208)
    w2 = jnp.zeros((_H1, _H2), f32).at[:208, :].set(wc.T)
    b2 = bc.reshape(1, -1).astype(f32)

    # --- fc2 ------------------------------------------------------------------
    wf2, bf2 = params["fc2"]           # (128, 256)
    w3 = wf2.T.astype(f32)             # (256, 128)
    b3 = bf2.reshape(1, -1).astype(f32)

    # --- fc3, output padded to multiple of 128, mask folded in ----------------
    wf3, bf3 = params["fc3"]           # (out_dim, 128)
    w4 = jnp.zeros((_H3, out_pad), f32).at[:, :out_dim].set(wf3.T)
    b4 = jnp.zeros((1, out_pad), f32).at[0, :out_dim].set(bf3)

    col = jnp.arange(out_pad, dtype=jnp.int32)
    task_idx = (col // max_employees) % max_tasks
    emp_idx = col % max_employees
    masked = ((task_idx >= num_tasks) | (emp_idx >= num_employees)) & (col < out_dim)
    # Masked columns: weights exactly 0 (so matmul contributes a finite 0),
    # -inf kept strictly in the f32 bias (never in bf16 weights).
    w4 = jnp.where(masked[None, :], 0.0, w4)
    b4 = jnp.where(masked[None, :], -jnp.inf, b4)

    w1, w2, w3, w4 = (w.astype(bf16) for w in (w1, w2, w3, w4))

    return {
        "weights": (w1, b1, w2, b2, w3, b3, w4, b4),
        "dims": {
            "k_raw": k_raw, "K1": K1,
            "out_dim": out_dim, "out_pad": out_pad,
            "max_tasks": max_tasks, "max_employees": max_employees,
        },
    }


# ---------------------------------------------------------------------------
# Tiling: big batch tiles (VMEM-budgeted), bf16-friendly 16-row padding,
# >= 2 grid steps when possible so megacore (v7x) is actually used.
# ---------------------------------------------------------------------------
def _choose_tiling(B, K1, out_pad, tile_b):
    h_sum = _H1 + _H2 + _H3 + out_pad

    def tile_bytes(tb):
        # double-buffered bf16 input tile + double-buffered f32 output tile
        # + f32 intermediates inside the kernel body.
        return 2 * tb * K1 * 2 + 2 * tb * out_pad * 4 + tb * h_sum * 4

    tb = max(16, _round_up(tile_b, 16))
    while tb > 16 and tile_bytes(tb) > _TILE_VMEM_BUDGET:
        tb = max(16, _round_up(tb // 2, 16))

    B_pad = _round_up(max(B, 1), 16)
    if B_pad <= tb:
        if B_pad % 32 == 0:
            return B_pad, B_pad // 2     # >= 2 parallel grid steps (v7x megacore)
        return B_pad, B_pad
    B_pad = _round_up(B, tb)
    return B_pad, tb


def _build_pallas_call(B_pad, TILE_B, K1, out_pad, single_buffer):
    f32 = jnp.float32

    if single_buffer:
        def const_spec(shape):
            # Constant block index -> DMA'd once; single buffer halves VMEM.
            return pl.BlockSpec(shape, lambda i: (0, 0), pipeline_mode=pl.Buffered(1))
    else:
        def const_spec(shape):
            return pl.BlockSpec(shape, lambda i: (0, 0))

    return pl.pallas_call(
        dqn_kernel,
        out_shape=jax.ShapeDtypeStruct((B_pad, out_pad), f32),
        grid_spec=pltpu.PrefetchScalarGridSpec(
            num_scalar_prefetch=0,
            grid=(B_pad // TILE_B,),
            in_specs=[
                pl.BlockSpec((TILE_B, K1), lambda i: (i, 0)),        # activations
                const_spec((K1, _H1)), const_spec((1, _H1)),          # W1, b1
                const_spec((_H1, _H2)), const_spec((1, _H2)),         # W2, b2
                const_spec((_H2, _H3)), const_spec((1, _H3)),         # W3, b3
                const_spec((_H3, out_pad)), const_spec((1, out_pad)), # W4, b4 (mask folded)
            ],
            out_specs=pl.BlockSpec((TILE_B, out_pad), lambda i: (i, 0)),
        ),
        compiler_params=pltpu.CompilerParams(
            dimension_semantics=("parallel",),
            vmem_limit_bytes=_VMEM_LIMIT_BYTES),
    )


def _call_kernel(weights, x, *, B_pad, TILE_B, K1, out_pad):
    global _SINGLE_BUFFER_WEIGHTS
    if _SINGLE_BUFFER_WEIGHTS:
        try:
            fn = _build_pallas_call(B_pad, TILE_B, K1, out_pad, True)
            return fn(x, *weights)
        except Exception:
            _SINGLE_BUFFER_WEIGHTS = False   # fall back to default double buffering
    fn = _build_pallas_call(B_pad, TILE_B, K1, out_pad, False)
    return fn(x, *weights)


# ---------------------------------------------------------------------------
# Per-call wrapper: only builds the bf16 activation slab and launches the kernel.
# ---------------------------------------------------------------------------
def dqn_forward(packed, state_matrix, workload_matrix, global_features, *, tile_b=512):
    bf16 = jnp.bfloat16
    dims = packed["dims"]
    K1, k_raw = dims["K1"], dims["k_raw"]
    out_pad, out_dim = dims["out_pad"], dims["out_dim"]
    max_tasks, max_employees = dims["max_tasks"], dims["max_employees"]

    B = state_matrix.shape[0]
    B_pad, TILE_B = _choose_tiling(B, K1, out_pad, tile_b)

    # Fused input [state | workload | global], built directly in bf16.
    x = jnp.concatenate(
        [state_matrix.reshape(B, -1).astype(bf16),
         workload_matrix.reshape(B, -1).astype(bf16),
         global_features.reshape(B, -1).astype(bf16)],
        axis=1)
    x = jnp.pad(x, ((0, B_pad - B), (0, K1 - k_raw)))

    q_flat = _call_kernel(packed["weights"], x,
                          B_pad=B_pad, TILE_B=TILE_B, K1=K1, out_pad=out_pad)

    return q_flat[:B, :out_dim].reshape(B, 2, max_tasks, max_employees)


# ---------------------------------------------------------------------------
# Pure-JAX f32 reference (mirrors the PyTorch module) for validation.
# ---------------------------------------------------------------------------
def dqn_reference(params, state_matrix, workload_matrix, global_features, *,
                  max_employees, max_tasks, num_employees, num_tasks):
    B = state_matrix.shape[0]

    def lin(name, x):
        w, b = params[name]
        return x @ w.T + b

    s = jax.nn.relu(lin("fc_state", state_matrix.reshape(B, -1)))
    w = jax.nn.relu(lin("fc_workload", workload_matrix.reshape(B, -1)))
    g = jax.nn.relu(lin("fc_global", global_features.reshape(B, -1)))
    h = jnp.concatenate([s, w, g], axis=1)
    h = jax.nn.relu(lin("fc_combined", h))
    h = jax.nn.relu(lin("fc2", h))
    q = lin("fc3", h).reshape(B, 2, max_tasks, max_employees)
    q = q.at[:, :, num_tasks:, :].set(-jnp.inf)
    q = q.at[:, :, :, num_employees:].set(-jnp.inf)
    return q


if __name__ == "__main__":
    B = 2
    max_tasks = 8
    max_employees = 8
    num_tasks = 5
    num_employees = 6

    key = jax.random.PRNGKey(0)
    k_params, k_s, k_w, k_g = jax.random.split(key, 4)

    params = make_dqn_params(k_params, max_employees, max_tasks)

    state_matrix = jax.random.normal(k_s, (B, max_tasks, 5), jnp.float32)
    workload_matrix = jax.random.normal(k_w, (B, max_employees), jnp.float32)
    global_features = jax.random.normal(k_g, (B, 3), jnp.float32)

    # One-time packing (hoisted out of the per-call path).
    packed = pack_dqn_params(
        params, max_employees=max_employees, max_tasks=max_tasks,
        num_employees=num_employees, num_tasks=num_tasks)

    q_values = dqn_forward(packed, state_matrix, workload_matrix, global_features)
    q_values = jax.block_until_ready(q_values)

    # Structural checks (match the PyTorch masking semantics).
    assert q_values.shape == (B, 2, max_tasks, max_employees)
    assert bool(jnp.all(jnp.isneginf(q_values[:, :, num_tasks:, :])))
    assert bool(jnp.all(jnp.isneginf(q_values[:, :, :, num_employees:])))
    assert bool(jnp.all(jnp.isfinite(q_values[:, :, :num_tasks, :num_employees])))

    # Loose numerical check vs. f32 reference (kernel uses bf16 weights/acts
    # with f32 accumulation, so allow a generous tolerance).
    ref = dqn_reference(
        params, state_matrix, workload_matrix, global_features,
        max_employees=max_employees, max_tasks=max_tasks,
        num_employees=num_employees, num_tasks=num_tasks)
    finite = jnp.isfinite(ref)
    err = float(jnp.max(jnp.abs(jnp.where(finite, q_values - ref, 0.0))))
    scale = float(jnp.max(jnp.abs(jnp.where(finite, ref, 0.0))))
    assert err <= 0.1 * scale + 0.1, f"bf16 kernel deviates too much: err={err}, scale={scale}"

    print("KERNEL_OK")
</pallas_src>

<mosaic_0001>
module attributes {stable_mosaic.version = 11 : i64} {
  func.func @dqn_kernel(%arg0: i32, %arg1: memref<16x128xbf16, #tpu.memory_space<vmem>>, %arg2: memref<128x256xbf16, #tpu.memory_space<vmem>>, %arg3: memref<1x256xf32, #tpu.memory_space<vmem>>, %arg4: memref<256x256xbf16, #tpu.memory_space<vmem>>, %arg5: memref<1x256xf32, #tpu.memory_space<vmem>>, %arg6: memref<256x128xbf16, #tpu.memory_space<vmem>>, %arg7: memref<1x128xf32, #tpu.memory_space<vmem>>, %arg8: memref<128x128xbf16, #tpu.memory_space<vmem>>, %arg9: memref<1x128xf32, #tpu.memory_space<vmem>>, %arg10: memref<16x128xf32, #tpu.memory_space<vmem>>) attributes {dimension_semantics = [#tpu.dimension_semantics<parallel>], iteration_bounds = array<i64: 1>, scalar_prefetch = 0 : i64, scratch_operands = 0 : i64, tpu.core_type = #tpu.core_type<tc>, window_params = [{transform_indices = @transform_0, window_bounds = array<i64: 16, 128>}, {pipeline_mode = #tpu.pipeline_mode<synchronous>, transform_indices = @transform_1, window_bounds = array<i64: 128, 256>}, {pipeline_mode = #tpu.pipeline_mode<synchronous>, transform_indices = @transform_2, window_bounds = array<i64: 1, 256>}, {pipeline_mode = #tpu.pipeline_mode<synchronous>, transform_indices = @transform_3, window_bounds = array<i64: 256, 256>}, {pipeline_mode = #tpu.pipeline_mode<synchronous>, transform_indices = @transform_4, window_bounds = array<i64: 1, 256>}, {pipeline_mode = #tpu.pipeline_mode<synchronous>, transform_indices = @transform_5, window_bounds = array<i64: 256, 128>}, {pipeline_mode = #tpu.pipeline_mode<synchronous>, transform_indices = @transform_6, window_bounds = array<i64: 1, 128>}, {pipeline_mode = #tpu.pipeline_mode<synchronous>, transform_indices = @transform_7, window_bounds = array<i64: 128, 128>}, {pipeline_mode = #tpu.pipeline_mode<synchronous>, transform_indices = @transform_8, window_bounds = array<i64: 1, 128>}, {transform_indices = @transform_9, window_bounds = array<i64: 16, 128>}]} {
    %c0 = arith.constant 0 : index
    %c0_0 = arith.constant 0 : index
    %0 = vector.load %arg1[%c0, %c0_0] : memref<16x128xbf16, #tpu.memory_space<vmem>>, vector<16x128xbf16>
    %c0_1 = arith.constant 0 : index
    %c0_2 = arith.constant 0 : index
    %1 = vector.load %arg2[%c0_1, %c0_2] : memref<128x256xbf16, #tpu.memory_space<vmem>>, vector<128x256xbf16>
    %cst = arith.constant dense<0.000000e+00> : vector<16x256xf32>
    %2 = tpu.matmul %0, %1, %cst {dimension_numbers = #tpu.dot_dimension_numbers<[1], [0], [0], [1], [0, 0, 1, 1], [], []>} : vector<16x128xbf16>, vector<128x256xbf16>, vector<16x256xf32> -> vector<16x256xf32>
    %c0_3 = arith.constant 0 : index
    %c0_4 = arith.constant 0 : index
    %3 = vector.load %arg3[%c0_3, %c0_4] : memref<1x256xf32, #tpu.memory_space<vmem>>, vector<1x256xf32>
    %4 = vector.broadcast %3 : vector<1x256xf32> to vector<16x256xf32>
    %5 = arith.addf %2, %4 : vector<16x256xf32>
    %cst_5 = arith.constant 0.000000e+00 : f32
    %6 = vector.broadcast %cst_5 : f32 to vector<16x256xf32>
    %7 = arith.maximumf %5, %6 : vector<16x256xf32>
    %8 = arith.truncf %7 : vector<16x256xf32> to vector<16x256xbf16>
    %c0_6 = arith.constant 0 : index
    %c0_7 = arith.constant 0 : index
    %9 = vector.load %arg4[%c0_6, %c0_7] : memref<256x256xbf16, #tpu.memory_space<vmem>>, vector<256x256xbf16>
    %cst_8 = arith.constant dense<0.000000e+00> : vector<16x256xf32>
    %10 = tpu.matmul %8, %9, %cst_8 {dimension_numbers = #tpu.dot_dimension_numbers<[1], [0], [0], [1], [0, 0, 1, 1], [], []>} : vector<16x256xbf16>, vector<256x256xbf16>, vector<16x256xf32> -> vector<16x256xf32>
    %c0_9 = arith.constant 0 : index
    %c0_10 = arith.constant 0 : index
    %11 = vector.load %arg5[%c0_9, %c0_10] : memref<1x256xf32, #tpu.memory_space<vmem>>, vector<1x256xf32>
    %12 = vector.broadcast %11 : vector<1x256xf32> to vector<16x256xf32>
    %13 = arith.addf %10, %12 : vector<16x256xf32>
    %cst_11 = arith.constant 0.000000e+00 : f32
    %14 = vector.broadcast %cst_11 : f32 to vector<16x256xf32>
    %15 = arith.maximumf %13, %14 : vector<16x256xf32>
    %16 = arith.truncf %15 : vector<16x256xf32> to vector<16x256xbf16>
    %c0_12 = arith.constant 0 : index
    %c0_13 = arith.constant 0 : index
    %17 = vector.load %arg6[%c0_12, %c0_13] : memref<256x128xbf16, #tpu.memory_space<vmem>>, vector<256x128xbf16>
    %cst_14 = arith.constant dense<0.000000e+00> : vector<16x128xf32>
    %18 = tpu.matmul %16, %17, %cst_14 {dimension_numbers = #tpu.dot_dimension_numbers<[1], [0], [0], [1], [0, 0, 1, 1], [], []>} : vector<16x256xbf16>, vector<256x128xbf16>, vector<16x128xf32> -> vector<16x128xf32>
    %c0_15 = arith.constant 0 : index
    %c0_16 = arith.constant 0 : index
    %19 = vector.load %arg7[%c0_15, %c0_16] : memref<1x128xf32, #tpu.memory_space<vmem>>, vector<1x128xf32>
    %20 = vector.broadcast %19 : vector<1x128xf32> to vector<16x128xf32>
    %21 = arith.addf %18, %20 : vector<16x128xf32>
    %cst_17 = arith.constant 0.000000e+00 : f32
    %22 = vector.broadcast %cst_17 : f32 to vector<16x128xf32>
    %23 = arith.maximumf %21, %22 : vector<16x128xf32>
    %24 = arith.truncf %23 : vector<16x128xf32> to vector<16x128xbf16>
    %c0_18 = arith.constant 0 : index
    %c0_19 = arith.constant 0 : index
    %25 = vector.load %arg8[%c0_18, %c0_19] : memref<128x128xbf16, #tpu.memory_space<vmem>>, vector<128x128xbf16>
    %cst_20 = arith.constant dense<0.000000e+00> : vector<16x128xf32>
    %26 = tpu.matmul %24, %25, %cst_20 {dimension_numbers = #tpu.dot_dimension_numbers<[1], [0], [0], [1], [0, 0, 1, 1], [], []>} : vector<16x128xbf16>, vector<128x128xbf16>, vector<16x128xf32> -> vector<16x128xf32>
    %c0_21 = arith.constant 0 : index
    %c0_22 = arith.constant 0 : index
    %27 = vector.load %arg9[%c0_21, %c0_22] : memref<1x128xf32, #tpu.memory_space<vmem>>, vector<1x128xf32>
    %28 = vector.broadcast %27 : vector<1x128xf32> to vector<16x128xf32>
    %29 = arith.addf %26, %28 : vector<16x128xf32>
    %c0_23 = arith.constant 0 : index
    %c0_24 = arith.constant 0 : index
    %30 = vector.load %arg10[%c0_23, %c0_24] : memref<16x128xf32, #tpu.memory_space<vmem>>, vector<16x128xf32>
    tpu.vector_store %arg10[%c0_23, %c0_24], %29 {strides = array<i32>} : memref<16x128xf32, #tpu.memory_space<vmem>>, vector<16x128xf32>,
    return
  }
  func.func @transform_0(%arg0: i32) -> (i32, i32) {
    %c0_i32 = arith.constant 0 : i32
    %c0_i32_0 = arith.constant 0 : i32
    return %arg0, %c0_i32 : i32, i32
  }
  func.func @transform_1(%arg0: i32) -> (i32, i32) {
    %c0_i32 = arith.constant 0 : i32
    %c0_i32_0 = arith.constant 0 : i32
    %c0_i32_1 = arith.constant 0 : i32
    return %c0_i32, %c0_i32_0 : i32, i32
  }
  func.func @transform_2(%arg0: i32) -> (i32, i32) {
    %c0_i32 = arith.constant 0 : i32
    %c0_i32_0 = arith.constant 0 : i32
    %c0_i32_1 = arith.constant 0 : i32
    return %c0_i32, %c0_i32_0 : i32, i32
  }
  func.func @transform_3(%arg0: i32) -> (i32, i32) {
    %c0_i32 = arith.constant 0 : i32
    %c0_i32_0 = arith.constant 0 : i32
    %c0_i32_1 = arith.constant 0 : i32
    return %c0_i32, %c0_i32_0 : i32, i32
  }
  func.func @transform_4(%arg0: i32) -> (i32, i32) {
    %c0_i32 = arith.constant 0 : i32
    %c0_i32_0 = arith.constant 0 : i32
    %c0_i32_1 = arith.constant 0 : i32
    return %c0_i32, %c0_i32_0 : i32, i32
  }
  func.func @transform_5(%arg0: i32) -> (i32, i32) {
    %c0_i32 = arith.constant 0 : i32
    %c0_i32_0 = arith.constant 0 : i32
    %c0_i32_1 = arith.constant 0 : i32
    return %c0_i32, %c0_i32_0 : i32, i32
  }
  func.func @transform_6(%arg0: i32) -> (i32, i32) {
    %c0_i32 = arith.constant 0 : i32
    %c0_i32_0 = arith.constant 0 : i32
    %c0_i32_1 = arith.constant 0 : i32
    return %c0_i32, %c0_i32_0 : i32, i32
  }
  func.func @transform_7(%arg0: i32) -> (i32, i32) {
    %c0_i32 = arith.constant 0 : i32
    %c0_i32_0 = arith.constant 0 : i32
    %c0_i32_1 = arith.constant 0 : i32
    return %c0_i32, %c0_i32_0 : i32, i32
  }
  func.func @transform_8(%arg0: i32) -> (i32, i32) {
    %c0_i32 = arith.constant 0 : i32
    %c0_i32_0 = arith.constant 0 : i32
    %c0_i32_1 = arith.constant 0 : i32
    return %c0_i32, %c0_i32_0 : i32, i32
  }
  func.func @transform_9(%arg0: i32) -> (i32, i32) {
    %c0_i32 = arith.constant 0 : i32
    %c0_i32_0 = arith.constant 0 : i32
    return %arg0, %c0_i32 : i32, i32
  }
}

module attributes {stable_mosaic.version = 11 : i64} {
  func.func @dqn_kernel(%arg0: i32, %arg1: memref<16x128xbf16, #tpu.memory_space<vmem>>, %arg2: memref<128x256xbf16, #tpu.memory_space<vmem>>, %arg3: memref<1x256xf32, #tpu.memory_space<vmem>>, %arg4: memref<256x256xbf16, #tpu.memory_space<vmem>>, %arg5: memref<1x256xf32, #tpu.memory_space<vmem>>, %arg6: memref<256x128xbf16, #tpu.memory_space<vmem>>, %arg7: memref<1x128xf32, #tpu.memory_space<vmem>>, %arg8: memref<128x128xbf16, #tpu.memory_space<vmem>>, %arg9: memref<1x128xf32, #tpu.memory_space<vmem>>, %arg10: memref<16x128xf32, #tpu.memory_space<vmem>>) attributes {dimension_semantics = [#tpu.dimension_semantics<parallel>], iteration_bounds = array<i64: 1>, scalar_prefetch = 0 : i64, scratch_operands = 0 : i64, tpu.core_type = #tpu.core_type<tc>, window_params = [{transform_indices = @transform_0, window_bounds = array<i64: 16, 128>}, {pipeline_mode = #tpu.pipeline_mode<synchronous>, transform_indices = @transform_1, window_bounds = array<i64: 128, 256>}, {pipeline_mode = #tpu.pipeline_mode<synchronous>, transform_indices = @transform_2, window_bounds = array<i64: 1, 256>}, {pipeline_mode = #tpu.pipeline_mode<synchronous>, transform_indices = @transform_3, window_bounds = array<i64: 256, 256>}, {pipeline_mode = #tpu.pipeline_mode<synchronous>, transform_indices = @transform_4, window_bounds = array<i64: 1, 256>}, {pipeline_mode = #tpu.pipeline_mode<synchronous>, transform_indices = @transform_5, window_bounds = array<i64: 256, 128>}, {pipeline_mode = #tpu.pipeline_mode<synchronous>, transform_indices = @transform_6, window_bounds = array<i64: 1, 128>}, {pipeline_mode = #tpu.pipeline_mode<synchronous>, transform_indices = @transform_7, window_bounds = array<i64: 128, 128>}, {pipeline_mode = #tpu.pipeline_mode<synchronous>, transform_indices = @transform_8, window_bounds = array<i64: 1, 128>}, {transform_indices = @transform_9, window_bounds = array<i64: 16, 128>}]} {
    %c0 = arith.constant 0 : index
    %c0_0 = arith.constant 0 : index
    %0 = vector.load %arg1[%c0, %c0_0] : memref<16x128xbf16, #tpu.memory_space<vmem>>, vector<16x128xbf16>
    %c0_1 = arith.constant 0 : index
    %c0_2 = arith.constant 0 : index
    %1 = vector.load %arg2[%c0_1, %c0_2] : memref<128x256xbf16, #tpu.memory_space<vmem>>, vector<128x256xbf16>
    %cst = arith.constant dense<0.000000e+00> : vector<16x256xf32>
    %2 = tpu.matmul %0, %1, %cst {dimension_numbers = #tpu.dot_dimension_numbers<[1], [0], [0], [1], [0, 0, 1, 1], [], []>} : vector<16x128xbf16>, vector<128x256xbf16>, vector<16x256xf32> -> vector<16x256xf32>
    %c0_3 = arith.constant 0 : index
    %c0_4 = arith.constant 0 : index
    %3 = vector.load %arg3[%c0_3, %c0_4] : memref<1x256xf32, #tpu.memory_space<vmem>>, vector<1x256xf32>
    %4 = vector.broadcast %3 : vector<1x256xf32> to vector<16x256xf32>
    %5 = arith.addf %2, %4 : vector<16x256xf32>
    %cst_5 = arith.constant 0.000000e+00 : f32
    %6 = vector.broadcast %cst_5 : f32 to vector<16x256xf32>
    %7 = arith.maximumf %5, %6 : vector<16x256xf32>
    %8 = arith.truncf %7 : vector<16x256xf32> to vector<16x256xbf16>
    %c0_6 = arith.constant 0 : index
    %c0_7 = arith.constant 0 : index
    %9 = vector.load %arg4[%c0_6, %c0_7] : memref<256x256xbf16, #tpu.memory_space<vmem>>, vector<256x256xbf16>
    %cst_8 = arith.constant dense<0.000000e+00> : vector<16x256xf32>
    %10 = tpu.matmul %8, %9, %cst_8 {dimension_numbers = #tpu.dot_dimension_numbers<[1], [0], [0], [1], [0, 0, 1, 1], [], []>} : vector<16x256xbf16>, vector<256x256xbf16>, vector<16x256xf32> -> vector<16x256xf32>
    %c0_9 = arith.constant 0 : index
    %c0_10 = arith.constant 0 : index
    %11 = vector.load %arg5[%c0_9, %c0_10] : memref<1x256xf32, #tpu.memory_space<vmem>>, vector<1x256xf32>
    %12 = vector.broadcast %11 : vector<1x256xf32> to vector<16x256xf32>
    %13 = arith.addf %10, %12 : vector<16x256xf32>
    %cst_11 = arith.constant 0.000000e+00 : f32
    %14 = vector.broadcast %cst_11 : f32 to vector<16x256xf32>
    %15 = arith.maximumf %13, %14 : vector<16x256xf32>
    %16 = arith.truncf %15 : vector<16x256xf32> to vector<16x256xbf16>
    %c0_12 = arith.constant 0 : index
    %c0_13 = arith.constant 0 : index
    %17 = vector.load %arg6[%c0_12, %c0_13] : memref<256x128xbf16, #tpu.memory_space<vmem>>, vector<256x128xbf16>
    %cst_14 = arith.constant dense<0.000000e+00> : vector<16x128xf32>
    %18 = tpu.matmul %16, %17, %cst_14 {dimension_numbers = #tpu.dot_dimension_numbers<[1], [0], [0], [1], [0, 0, 1, 1], [], []>} : vector<16x256xbf16>, vector<256x128xbf16>, vector<16x128xf32> -> vector<16x128xf32>
    %c0_15 = arith.constant 0 : index
    %c0_16 = arith.constant 0 : index
    %19 = vector.load %arg7[%c0_15, %c0_16] : memref<1x128xf32, #tpu.memory_space<vmem>>, vector<1x128xf32>
    %20 = vector.broadcast %19 : vector<1x128xf32> to vector<16x128xf32>
    %21 = arith.addf %18, %20 : vector<16x128xf32>
    %cst_17 = arith.constant 0.000000e+00 : f32
    %22 = vector.broadcast %cst_17 : f32 to vector<16x128xf32>
    %23 = arith.maximumf %21, %22 : vector<16x128xf32>
    %24 = arith.truncf %23 : vector<16x128xf32> to vector<16x128xbf16>
    %c0_18 = arith.constant 0 : index
    %c0_19 = arith.constant 0 : index
    %25 = vector.load %arg8[%c0_18, %c0_19] : memref<128x128xbf16, #tpu.memory_space<vmem>>, vector<128x128xbf16>
    %cst_20 = arith.constant dense<0.000000e+00> : vector<16x128xf32>
    %26 = tpu.matmul %24, %25, %cst_20 {dimension_numbers = #tpu.dot_dimension_numbers<[1], [0], [0], [1], [0, 0, 1, 1], [], []>} : vector<16x128xbf16>, vector<128x128xbf16>, vector<16x128xf32> -> vector<16x128xf32>
    %c0_21 = arith.constant 0 : index
    %c0_22 = arith.constant 0 : index
    %27 = vector.load %arg9[%c0_21, %c0_22] : memref<1x128xf32, #tpu.memory_space<vmem>>, vector<1x128xf32>
    %28 = vector.broadcast %27 : vector<1x128xf32> to vector<16x128xf32>
    %29 = arith.addf %26, %28 : vector<16x128xf32>
    %c0_23 = arith.constant 0 : index
    %c0_24 = arith.constant 0 : index
    %30 = vector.load %arg10[%c0_23, %c0_24] : memref<16x128xf32, #tpu.memory_space<vmem>>, vector<16x128xf32>
    tpu.vector_store %arg10[%c0_23, %c0_24], %29 {strides = array<i32>} : memref<16x128xf32, #tpu.memory_space<vmem>>, vector<16x128xf32>,
    return
  }
  func.func @transform_0(%arg0: i32) -> (i32, i32) {
    %c0_i32 = arith.constant 0 : i32
    %c0_i32_0 = arith.constant 0 : i32
    return %arg0, %c0_i32 : i32, i32
  }
  func.func @transform_1(%arg0: i32) -> (i32, i32) {
    %c0_i32 = arith.constant 0 : i32
    %c0_i32_0 = arith.constant 0 : i32
    %c0_i32_1 = arith.constant 0 : i32
    return %c0_i32, %c0_i32_0 : i32, i32
  }
  func.func @transform_2(%arg0: i32) -> (i32, i32) {
    %c0_i32 = arith.constant 0 : i32
    %c0_i32_0 = arith.constant 0 : i32
    %c0_i32_1 = arith.constant 0 : i32
    return %c0_i32, %c0_i32_0 : i32, i32
  }
  func.func @transform_3(%arg0: i32) -> (i32, i32) {
    %c0_i32 = arith.constant 0 : i32
    %c0_i32_0 = arith.constant 0 : i32
    %c0_i32_1 = arith.constant 0 : i32
    return %c0_i32, %c0_i32_0 : i32, i32
  }
  func.func @transform_4(%arg0: i32) -> (i32, i32) {
    %c0_i32 = arith.constant 0 : i32
    %c0_i32_0 = arith.constant 0 : i32
    %c0_i32_1 = arith.constant 0 : i32
    return %c0_i32, %c0_i32_0 : i32, i32
  }
  func.func @transform_5(%arg0: i32) -> (i32, i32) {
    %c0_i32 = arith.constant 0 : i32
    %c0_i32_0 = arith.constant 0 : i32
    %c0_i32_1 = arith.constant 0 : i32
    return %c0_i32, %c0_i32_0 : i32, i32
  }
  func.func @transform_6(%arg0: i32) -> (i32, i32) {
    %c0_i32 = arith.constant 0 : i32
    %c0_i32_0 = arith.constant 0 : i32
    %c0_i32_1 = arith.constant 0 : i32
    return %c0_i32, %c0_i32_0 : i32, i32
  }
  func.func @transform_7(%arg0: i32) -> (i32, i32) {
    %c0_i32 = arith.constant 0 : i32
    %c0_i32_0 = arith.constant 0 : i32
    %c0_i32_1 = arith.constant 0 : i32
    return %c0_i32, %c0_i32_0 : i32, i32
  }
  func.func @transform_8(%arg0: i32) -> (i32, i32) {
    %c0_i32 = arith.constant 0 : i32
    %c0_i32_0 = arith.constant 0 : i32
    %c0_i32_1 = arith.constant 0 : i32
    return %c0_i32, %c0_i32_0 : i32, i32
  }
  func.func @transform_9(%arg0: i32) -> (i32, i32) {
    %c0_i32 = arith.constant 0 : i32
    %c0_i32_0 = arith.constant 0 : i32
    return %arg0, %c0_i32 : i32, i32
  }
}

</mosaic_0001>

<llo_original>
// kernel: tpu_custom_call.1
$region0: #{tpu_custom_call.1}
  #allocation0 [shape = 'u32[]', space=smem, size = 0x4, offset = 0x4, fixed_abs, tag = 'smem constant byte address 0x4 - core index']
  #allocation1 [shape = 'u32[144,128]{1,0:T(1,128)}', space=vmem, size = 0x12000, scoped, tag = 'internal scratch']
  %s0 = inlined_call_operand.hbm [shape: bf16[16,128], index: 0, kind: input, shape index: {}]
  %s1 = inlined_call_operand.hbm [shape: bf16[128,256], index: 1, kind: input, shape index: {}]
  %s2 = inlined_call_operand.vmem [shape: f32[1,256], index: 2, kind: input, shape index: {}]
  %s3 = inlined_call_operand.hbm [shape: bf16[256,256], index: 3, kind: input, shape index: {}]
  %s4 = inlined_call_operand.vmem [shape: f32[1,256], index: 4, kind: input, shape index: {}]
  %s5 = inlined_call_operand.hbm [shape: bf16[256,128], index: 5, kind: input, shape index: {}]
  %s6 = inlined_call_operand.vmem [shape: f32[1,128], index: 6, kind: input, shape index: {}]
  %s7 = inlined_call_operand.hbm [shape: bf16[128,128], index: 7, kind: input, shape index: {}]
  %s8 = inlined_call_operand.vmem [shape: f32[1,128], index: 8, kind: input, shape index: {}]
  %s9 = inlined_call_operand.hbm [shape: f32[16,128], index: 9, kind: output, shape index: {}]
  %s10 = sld [smem:[#allocation0]]
  $region66: #{tpu_custom_call.1} parent=0
    _
  %s12 = ssub.s32 1, %s10
  %s13 = scalar_select 0, %s12, %s10
  $region1: #{tpu_custom_call.1} parent=0
    #allocation2 [shape = 'u8[4096]{0}', space=vmem, size = 0x1000, scoped, tag = 'input window, operand 0, single buffered']
    #allocation3 [shape = 's32[1]{0}', space=sflag, size = 0x4, scoped, tag = 'scoped memory for tpu_custom_call.1']
    #allocation4 [shape = 's32[1]{0}', space=sflag, size = 0x4, scoped, tag = 'scoped memory for tpu_custom_call.1']
    #allocation5 [shape = 'u8[65536]{0}', space=vmem, size = 0x10000, scoped, tag = 'input window, operand 1, single buffered']
    #allocation6 [shape = 's32[1]{0}', space=sflag, size = 0x4, scoped, tag = 'scoped memory for tpu_custom_call.1']
    #allocation7 [shape = 'u8[131072]{0}', space=vmem, size = 0x20000, scoped, tag = 'input window, operand 3, single buffered']
    #allocation8 [shape = 'u8[65536]{0}', space=vmem, size = 0x10000, scoped, tag = 'input window, operand 5, single buffered']
    #allocation9 [shape = 's32[1]{0}', space=sflag, size = 0x4, scoped, tag = 'scoped memory for tpu_custom_call.1']
    #allocation10 [shape = 'u8[32768]{0}', space=vmem, size = 0x8000, scoped, tag = 'input window, operand 7, single buffered']
    #allocation11 [shape = 'u8[8192]{0}', space=vmem, size = 0x2000, scoped, tag = 'output window, operand 0, single buffered']
    %14 = vsyncpa [#allocation3], 0
    %15 = vsyncpa [#allocation6], 0
    %16 = vsyncpa [#allocation9], 0
    %17 = vsyncpa [#allocation4], 0
    // Predicated region
    $region2: #{tpu_custom_call.1} parent=1 // pred_check
      _
    $region3: #{tpu_custom_call.1} parent=1 // pred_check_branch
      %19 = sbr.rel (0) target = $region5
    $region4: #{tpu_custom_call.1} parent=1 // pred_region
      %s21 = ssub.s32 128, 128
      %22 = vsyncadd [#allocation3], %s21
      %s23 = sshll.u32 [#allocation2], 4
      %s24 = int_to_ptr.vmem [resolvable:$true] %s23
      %29 = dma.hbm_to_vmem [thread:$0]  %s0, 128, %s24, [#allocation3], 64, 64, 4
    $region5: #{tpu_custom_call.1} parent=1 // pred_fallthru
      _
    // Predicated region
    $region6: #{tpu_custom_call.1} parent=1 // pred_check
      _
    $region7: #{tpu_custom_call.1} parent=1 // pred_check_branch
      %31 = sbr.rel (0) target = $region9
    $region8: #{tpu_custom_call.1} parent=1 // pred_region
      %s33 = ssub.s32 2048, 2048
      %34 = vsyncadd [#allocation6], %s33
      %s35 = sshll.u32 [#allocation5], 4
      %s36 = int_to_ptr.vmem [resolvable:$true] %s35
      %41 = dma.hbm_to_vmem [thread:$0]  %s1, 2048, %s36, [#allocation6], 128, 128, 8
    $region9: #{tpu_custom_call.1} parent=1 // pred_fallthru
      _
    // Predicated region
    $region10: #{tpu_custom_call.1} parent=1 // pred_check
      _
    $region11: #{tpu_custom_call.1} parent=1 // pred_check_branch
      %43 = sbr.rel (0) target = $region13
    $region12: #{tpu_custom_call.1} parent=1 // pred_region
      _
    $region13: #{tpu_custom_call.1} parent=1 // pred_fallthru
      _
    // Predicated region
    $region14: #{tpu_custom_call.1} parent=1 // pred_check
      _
    $region15: #{tpu_custom_call.1} parent=1 // pred_check_branch
      %45 = sbr.rel (0) target = $region17
    $region16: #{tpu_custom_call.1} parent=1 // pred_region
      %s47 = ssub.s32 4096, 4096
      %48 = vsyncadd [#allocation6], %s47
      %s49 = sshll.u32 [#allocation7], 4
      %s50 = int_to_ptr.vmem [resolvable:$true] %s49
      %55 = dma.hbm_to_vmem [thread:$0]  %s3, 4096, %s50, [#allocation6], 128, 128, 8
    $region17: #{tpu_custom_call.1} parent=1 // pred_fallthru
      _
    // Predicated region
    $region18: #{tpu_custom_call.1} parent=1 // pred_check
      _
    $region19: #{tpu_custom_call.1} parent=1 // pred_check_branch
      %57 = sbr.rel (0) target = $region21
    $region20: #{tpu_custom_call.1} parent=1 // pred_region
      _
    $region21: #{tpu_custom_call.1} parent=1 // pred_fallthru
      _
    // Predicated region
    $region22: #{tpu_custom_call.1} parent=1 // pred_check
      _
    $region23: #{tpu_custom_call.1} parent=1 // pred_check_branch
      %59 = sbr.rel (0) target = $region25
    $region24: #{tpu_custom_call.1} parent=1 // pred_region
      %s61 = ssub.s32 2048, 2048
      %62 = vsyncadd [#allocation9], %s61
      %s63 = sshll.u32 [#allocation8], 4
      %s64 = int_to_ptr.vmem [resolvable:$true] %s63
      %69 = dma.hbm_to_vmem [thread:$0]  %s5, 2048, %s64, [#allocation9], 64, 64, 4
    $region25: #{tpu_custom_call.1} parent=1 // pred_fallthru
      _
    // Predicated region
    $region26: #{tpu_custom_call.1} parent=1 // pred_check
      _
    $region27: #{tpu_custom_call.1} parent=1 // pred_check_branch
      %71 = sbr.rel (0) target = $region29
    $region28: #{tpu_custom_call.1} parent=1 // pred_region
      _
    $region29: #{tpu_custom_call.1} parent=1 // pred_fallthru
      _
    // Predicated region
    $region30: #{tpu_custom_call.1} parent=1 // pred_check
      _
    $region31: #{tpu_custom_call.1} parent=1 // pred_check_branch
      %73 = sbr.rel (0) target = $region33
    $region32: #{tpu_custom_call.1} parent=1 // pred_region
      %s75 = ssub.s32 1024, 1024
      %76 = vsyncadd [#allocation9], %s75
      %s77 = sshll.u32 [#allocation10], 4
      %s78 = int_to_ptr.vmem [resolvable:$true] %s77
      %83 = dma.hbm_to_vmem [thread:$0]  %s7, 1024, %s78, [#allocation9], 64, 64, 4
    $region33: #{tpu_custom_call.1} parent=1 // pred_fallthru
      _
    // Predicated region
    $region34: #{tpu_custom_call.1} parent=1 // pred_check
      _
    $region35: #{tpu_custom_call.1} parent=1 // pred_check_branch
      %85 = sbr.rel (0) target = $region37
    $region36: #{tpu_custom_call.1} parent=1 // pred_region
      _
    $region37: #{tpu_custom_call.1} parent=1 // pred_fallthru
      _
    // Predicated region
    $region38: #{tpu_custom_call.1} parent=1 // pred_check
      _
    $region39: #{tpu_custom_call.1} parent=1 // pred_check_branch
      %87 = sbr.rel (0) target = $region41
    $region40: #{tpu_custom_call.1} parent=1 // pred_region
      %88 = dma.done [#allocation3], 128
    $region41: #{tpu_custom_call.1} parent=1 // pred_fallthru
      _
    // Predicated region
    $region42: #{tpu_custom_call.1} parent=1 // pred_check
      _
    $region43: #{tpu_custom_call.1} parent=1 // pred_check_branch
      %90 = sbr.rel (0) target = $region45
    $region44: #{tpu_custom_call.1} parent=1 // pred_region
      %91 = dma.done [#allocation6], 2048
    $region45: #{tpu_custom_call.1} parent=1 // pred_fallthru
      _
    // Predicated region
    $region46: #{tpu_custom_call.1} parent=1 // pred_check
      _
    $region47: #{tpu_custom_call.1} parent=1 // pred_check_branch
      %93 = sbr.rel (0) target = $region49
    $region48: #{tpu_custom_call.1} parent=1 // pred_region
      %94 = dma.done [#allocation6], 4096
    $region49: #{tpu_custom_call.1} parent=1 // pred_fallthru
      _
    // Predicated region
    $region50: #{tpu_custom_call.1} parent=1 // pred_check
      _
    $region51: #{tpu_custom_call.1} parent=1 // pred_check_branch
      %96 = sbr.rel (0) target = $region53
    $region52: #{tpu_custom_call.1} parent=1 // pred_region
      %97 = dma.done [#allocation9], 2048
    $region53: #{tpu_custom_call.1} parent=1 // pred_fallthru
      _
    // Predicated region
    $region54: #{tpu_custom_call.1} parent=1 // pred_check
      _
    $region55: #{tpu_custom_call.1} parent=1 // pred_check_branch
      %99 = sbr.rel (0) target = $region57
    $region56: #{tpu_custom_call.1} parent=1 // pred_region
      %100 = dma.done [#allocation9], 1024
    $region57: #{tpu_custom_call.1} parent=1 // pred_fallthru
      _
    %v102 = vld [vmem:[#allocation2] sm:$0xf]
    %v103 = vld [vmem:[#allocation2 + $0x4] sm:$0xf]
    %v104 = vld [vmem:[#allocation5] sm:$0xff]
    %v105 = vld [vmem:[#allocation5 + $0x8] sm:$0xff]
    %v106 = vld [vmem:[#allocation5 + $0x10] sm:$0xff]
    %v107 = vld [vmem:[#allocation5 + $0x18] sm:$0xff]
    %v108 = vld [vmem:[#allocation5 + $0x20] sm:$0xff]
    %v109 = vld [vmem:[#allocation5 + $0x28] sm:$0xff]
    %v110 = vld [vmem:[#allocation5 + $0x30] sm:$0xff]
    %v111 = vld [vmem:[#allocation5 + $0x38] sm:$0xff]
    %v112 = vld [vmem:[#allocation5 + $0x40] sm:$0xff]
    %v113 = vld [vmem:[#allocation5 + $0x48] sm:$0xff]
    %v114 = vld [vmem:[#allocation5 + $0x50] sm:$0xff]
    %v115 = vld [vmem:[#allocation5 + $0x58] sm:$0xff]
    %v116 = vld [vmem:[#allocation5 + $0x60] sm:$0xff]
    %v117 = vld [vmem:[#allocation5 + $0x68] sm:$0xff]
    %v118 = vld [vmem:[#allocation5 + $0x70] sm:$0xff]
    %v119 = vld [vmem:[#allocation5 + $0x78] sm:$0xff]
    %v120 = vld [vmem:[%s2] sm:$0x3]
    %v122 = vlaneseq
    %v123 = vshrl.u32 %v122, 7
    %v124 = vsub.s32 0, %v123
    %v125 = vrot.slane %v120, %v124
    %v126 = vlaneseq
    %v127 = vshrl.u32 %v126, 7
    %v128 = vsub.s32 1, %v127
    %v129 = vrot.slane %v120, %v128
    %v134 = vunpack.c.l.b16 %v102
    %v135 = vunpack.c.l.b16 %v103
    %v136 = vpack.c.b16 %v135, %v134
    %v154 = vunpack.c.l.b16 %v104
    %v155 = vunpack.c.h.b16 %v104
    %v156 = vunpack.c.l.b16 %v105
    %v157 = vunpack.c.h.b16 %v105
    %v158 = vunpack.c.l.b16 %v106
    %v159 = vunpack.c.h.b16 %v106
    %v160 = vunpack.c.l.b16 %v107
    %v161 = vunpack.c.h.b16 %v107
    %v162 = vunpack.c.l.b16 %v108
    %v163 = vunpack.c.h.b16 %v108
    %v164 = vunpack.c.l.b16 %v109
    %v165 = vunpack.c.h.b16 %v109
    %v166 = vunpack.c.l.b16 %v110
    %v167 = vunpack.c.h.b16 %v110
    %v168 = vunpack.c.l.b16 %v111
    %v169 = vunpack.c.h.b16 %v111
    %v170 = vunpack.c.l.b16 %v112
    %v171 = vunpack.c.h.b16 %v112
    %v172 = vunpack.c.l.b16 %v113
    %v173 = vunpack.c.h.b16 %v113
    %v174 = vunpack.c.l.b16 %v114
    %v175 = vunpack.c.h.b16 %v114
    %v176 = vunpack.c.l.b16 %v115
    %v177 = vunpack.c.h.b16 %v115
    %v178 = vunpack.c.l.b16 %v116
    %v179 = vunpack.c.h.b16 %v116
    %v180 = vunpack.c.l.b16 %v117
    %v181 = vunpack.c.h.b16 %v117
    %v182 = vunpack.c.l.b16 %v118
    %v183 = vunpack.c.h.b16 %v118
    %v184 = vunpack.c.l.b16 %v119
    %v185 = vunpack.c.h.b16 %v119
    %v186 = vpack.c.b16 %v156, %v154
    %v187 = vpack.c.b16 %v157, %v155
    %v188 = vpack.c.b16 %v160, %v158
    %v189 = vpack.c.b16 %v161, %v159
    %v190 = vpack.c.b16 %v164, %v162
    %v191 = vpack.c.b16 %v165, %v163
    %v192 = vpack.c.b16 %v168, %v166
    %v193 = vpack.c.b16 %v169, %v167
    %v194 = vpack.c.b16 %v172, %v170
    %v195 = vpack.c.b16 %v173, %v171
    %v196 = vpack.c.b16 %v176, %v174
    %v197 = vpack.c.b16 %v177, %v175
    %v198 = vpack.c.b16 %v180, %v178
    %v199 = vpack.c.b16 %v181, %v179
    %v200 = vpack.c.b16 %v184, %v182
    %v201 = vpack.c.b16 %v185, %v183
    %218 = vmatprep.subr.bf16.mxu0 %v187
    %219 = vmatpush1.bf16.msra.mxu0 %v186
    %220 = vmatprep.subr.bf16.mxu0 %v189
    %221 = vmatpush1.bf16.msra.mxu0 %v188
    %222 = vmatprep.subr.bf16.mxu0 %v191
    %223 = vmatpush1.bf16.msra.mxu0 %v190
    %224 = vmatprep.subr.bf16.mxu0 %v193
    %225 = vmatpush1.bf16.msra.mxu0 %v192
    %226 = vmatprep.subr.bf16.mxu0 %v195
    %227 = vmatpush1.bf16.msra.mxu0 %v194
    %228 = vmatprep.subr.bf16.mxu0 %v197
    %229 = vmatpush1.bf16.msra.mxu0 %v196
    %230 = vmatprep.subr.bf16.mxu0 %v199
    %231 = vmatpush1.bf16.msra.mxu0 %v198
    %232 = vmatprep.subr.bf16.mxu0 %v201
    %233 = vmatpush1.bf16.msra.mxu0 %v200
    %234 = vmatprep.subr.bf16.mxu0 0
    %235 = vmatpush1.bf16.msra.mxu0 0
    %236 = vmatprep.subr.bf16.mxu0 0
    %237 = vmatpush1.bf16.msra.mxu0 0
    %238 = vmatprep.subr.bf16.mxu0 0
    %239 = vmatpush1.bf16.msra.mxu0 0
    %240 = vmatprep.subr.bf16.mxu0 0
    %241 = vmatpush1.bf16.msra.mxu0 0
    %242 = vmatprep.subr.bf16.mxu0 0
    %243 = vmatpush1.bf16.msra.mxu0 0
    %244 = vmatprep.subr.bf16.mxu0 0
    %245 = vmatpush1.bf16.msra.mxu0 0
    %246 = vmatprep.subr.bf16.mxu0 0
    %247 = vmatpush1.bf16.msra.mxu0 0
    %248 = vmatprep.subr.bf16.mxu0 0
    %249 = vmatpush1.bf16.msra.mxu0 0
    %250 = vmatprep.mubr.bf16.mxu0 0
    %251 = vmatmul.mubr.bf16.gmra.mrb[0].mxu0 %v136
    %v252 = vpop.f32.mrb[0].mxu0
    %v253 = vadd.f32 %v125, %v252
    %v254 = vpop.f32.mrb[0].mxu0
    %v255 = vadd.f32 %v129, %v254
    %v256 = vpop.f32.mrb[0].mxu0
    %v257 = vadd.f32 %v125, %v256
    %v258 = vpop.f32.mrb[0].mxu0
    %v259 = vadd.f32 %v129, %v258
    %260 = vdwg.mxu0
    %v261 = vmax.f32 %v253, 0.0
    %v262 = vmax.f32 %v255, 0.0
    %v263 = vmax.f32 %v257, 0.0
    %v264 = vmax.f32 %v259, 0.0
    %v265 = vpack.c.bf16 %v263, %v261
    %v266 = vpack.c.bf16 %v264, %v262
    %v267 = vld [vmem:[#allocation7] sm:$0xff]
    %v268 = vld [vmem:[#allocation7 + $0x8] sm:$0xff]
    %v269 = vld [vmem:[#allocation7 + $0x10] sm:$0xff]
    %v270 = vld [vmem:[#allocation7 + $0x18] sm:$0xff]
    %v271 = vld [vmem:[#allocation7 + $0x20] sm:$0xff]
    %v272 = vld [vmem:[#allocation7 + $0x28] sm:$0xff]
    %v273 = vld [vmem:[#allocation7 + $0x30] sm:$0xff]
    %v274 = vld [vmem:[#allocation7 + $0x38] sm:$0xff]
    %v275 = vld [vmem:[#allocation7 + $0x40] sm:$0xff]
    %v276 = vld [vmem:[#allocation7 + $0x48] sm:$0xff]
    %v277 = vld [vmem:[#allocation7 + $0x50] sm:$0xff]
    %v278 = vld [vmem:[#allocation7 + $0x58] sm:$0xff]
    %v279 = vld [vmem:[#allocation7 + $0x60] sm:$0xff]
    %v280 = vld [vmem:[#allocation7 + $0x68] sm:$0xff]
    %v281 = vld [vmem:[#allocation7 + $0x70] sm:$0xff]
    %v282 = vld [vmem:[#allocation7 + $0x78] sm:$0xff]
    %v283 = vld [vmem:[#allocation7 + $0x80] sm:$0xff]
    %v284 = vld [vmem:[#allocation7 + $0x88] sm:$0xff]
    %v285 = vld [vmem:[#allocation7 + $0x90] sm:$0xff]
    %v286 = vld [vmem:[#allocation7 + $0x98] sm:$0xff]
    %v287 = vld [vmem:[#allocation7 + $0xa0] sm:$0xff]
    %v288 = vld [vmem:[#allocation7 + $0xa8] sm:$0xff]
    %v289 = vld [vmem:[#allocation7 + $0xb0] sm:$0xff]
    %v290 = vld [vmem:[#allocation7 + $0xb8] sm:$0xff]
    %v291 = vld [vmem:[#allocation7 + $0xc0] sm:$0xff]
    %v292 = vld [vmem:[#allocation7 + $0xc8] sm:$0xff]
    %v293 = vld [vmem:[#allocation7 + $0xd0] sm:$0xff]
    %v294 = vld [vmem:[#allocation7 + $0xd8] sm:$0xff]
    %v295 = vld [vmem:[#allocation7 + $0xe0] sm:$0xff]
    %v296 = vld [vmem:[#allocation7 + $0xe8] sm:$0xff]
    %v297 = vld [vmem:[#allocation7 + $0xf0] sm:$0xff]
    %v298 = vld [vmem:[#allocation7 + $0xf8] sm:$0xff]
    %v299 = vld [vmem:[%s4] sm:$0x3]
    %v301 = vlaneseq
    %v302 = vshrl.u32 %v301, 7
    %v303 = vsub.s32 0, %v302
    %v304 = vrot.slane %v299, %v303
    %v305 = vlaneseq
    %v306 = vshrl.u32 %v305, 7
    %v307 = vsub.s32 1, %v306
    %v308 = vrot.slane %v299, %v307
    %v343 = vunpack.c.l.b16 %v267
    %v344 = vunpack.c.h.b16 %v267
    %v345 = vunpack.c.l.b16 %v268
    %v346 = vunpack.c.h.b16 %v268
    %v347 = vunpack.c.l.b16 %v269
    %v348 = vunpack.c.h.b16 %v269
    %v349 = vunpack.c.l.b16 %v270
    %v350 = vunpack.c.h.b16 %v270
    %v351 = vunpack.c.l.b16 %v271
    %v352 = vunpack.c.h.b16 %v271
    %v353 = vunpack.c.l.b16 %v272
    %v354 = vunpack.c.h.b16 %v272
    %v355 = vunpack.c.l.b16 %v273
    %v356 = vunpack.c.h.b16 %v273
    %v357 = vunpack.c.l.b16 %v274
    %v358 = vunpack.c.h.b16 %v274
    %v359 = vunpack.c.l.b16 %v275
    %v360 = vunpack.c.h.b16 %v275
    %v361 = vunpack.c.l.b16 %v276
    %v362 = vunpack.c.h.b16 %v276
    %v363 = vunpack.c.l.b16 %v277
    %v364 = vunpack.c.h.b16 %v277
    %v365 = vunpack.c.l.b16 %v278
    %v366 = vunpack.c.h.b16 %v278
    %v367 = vunpack.c.l.b16 %v279
    %v368 = vunpack.c.h.b16 %v279
    %v369 = vunpack.c.l.b16 %v280
    %v370 = vunpack.c.h.b16 %v280
    %v371 = vunpack.c.l.b16 %v281
    %v372 = vunpack.c.h.b16 %v281
    %v373 = vunpack.c.l.b16 %v282
    %v374 = vunpack.c.h.b16 %v282
    %v375 = vunpack.c.l.b16 %v283
    %v376 = vunpack.c.h.b16 %v283
    %v377 = vunpack.c.l.b16 %v284
    %v378 = vunpack.c.h.b16 %v284
    %v379 = vunpack.c.l.b16 %v285
    %v380 = vunpack.c.h.b16 %v285
    %v381 = vunpack.c.l.b16 %v286
    %v382 = vunpack.c.h.b16 %v286
    %v383 = vunpack.c.l.b16 %v287
    %v384 = vunpack.c.h.b16 %v287
    %v385 = vunpack.c.l.b16 %v288
    %v386 = vunpack.c.h.b16 %v288
    %v387 = vunpack.c.l.b16 %v289
    %v388 = vunpack.c.h.b16 %v289
    %v389 = vunpack.c.l.b16 %v290
    %v390 = vunpack.c.h.b16 %v290
    %v391 = vunpack.c.l.b16 %v291
    %v392 = vunpack.c.h.b16 %v291
    %v393 = vunpack.c.l.b16 %v292
    %v394 = vunpack.c.h.b16 %v292
    %v395 = vunpack.c.l.b16 %v293
    %v396 = vunpack.c.h.b16 %v293
    %v397 = vunpack.c.l.b16 %v294
    %v398 = vunpack.c.h.b16 %v294
    %v399 = vunpack.c.l.b16 %v295
    %v400 = vunpack.c.h.b16 %v295
    %v401 = vunpack.c.l.b16 %v296
    %v402 = vunpack.c.h.b16 %v296
    %v403 = vunpack.c.l.b16 %v297
    %v404 = vunpack.c.h.b16 %v297
    %v405 = vunpack.c.l.b16 %v298
    %v406 = vunpack.c.h.b16 %v298
    %v407 = vpack.c.b16 %v345, %v343
    %v408 = vpack.c.b16 %v346, %v344
    %v409 = vpack.c.b16 %v349, %v347
    %v410 = vpack.c.b16 %v350, %v348
    %v411 = vpack.c.b16 %v353, %v351
    %v412 = vpack.c.b16 %v354, %v352
    %v413 = vpack.c.b16 %v357, %v355
    %v414 = vpack.c.b16 %v358, %v356
    %v415 = vpack.c.b16 %v361, %v359
    %v416 = vpack.c.b16 %v362, %v360
    %v417 = vpack.c.b16 %v365, %v363
    %v418 = vpack.c.b16 %v366, %v364
    %v419 = vpack.c.b16 %v369, %v367
    %v420 = vpack.c.b16 %v370, %v368
    %v421 = vpack.c.b16 %v373, %v371
    %v422 = vpack.c.b16 %v374, %v372
    %v423 = vpack.c.b16 %v377, %v375
    %v424 = vpack.c.b16 %v378, %v376
    %v425 = vpack.c.b16 %v381, %v379
    %v426 = vpack.c.b16 %v382, %v380
    %v427 = vpack.c.b16 %v385, %v383
    %v428 = vpack.c.b16 %v386, %v384
    %v429 = vpack.c.b16 %v389, %v387
    %v430 = vpack.c.b16 %v390, %v388
    %v431 = vpack.c.b16 %v393, %v391
    %v432 = vpack.c.b16 %v394, %v392
    %v433 = vpack.c.b16 %v397, %v395
    %v434 = vpack.c.b16 %v398, %v396
    %v435 = vpack.c.b16 %v401, %v399
    %v436 = vpack.c.b16 %v402, %v400
    %v437 = vpack.c.b16 %v405, %v403
    %v438 = vpack.c.b16 %v406, %v404
    %471 = vmatprep.subr.bf16.mxu0 %v408
    %472 = vmatpush1.bf16.msra.mxu0 %v407
    %473 = vmatprep.subr.bf16.mxu0 %v410
    %474 = vmatpush1.bf16.msra.mxu0 %v409
    %475 = vmatprep.subr.bf16.mxu0 %v412
    %476 = vmatpush1.bf16.msra.mxu0 %v411
    %477 = vmatprep.subr.bf16.mxu0 %v414
    %478 = vmatpush1.bf16.msra.mxu0 %v413
    %479 = vmatprep.subr.bf16.mxu0 %v416
    %480 = vmatpush1.bf16.msra.mxu0 %v415
    %481 = vmatprep.subr.bf16.mxu0 %v418
    %482 = vmatpush1.bf16.msra.mxu0 %v417
    %483 = vmatprep.subr.bf16.mxu0 %v420
    %484 = vmatpush1.bf16.msra.mxu0 %v419
    %485 = vmatprep.subr.bf16.mxu0 %v422
    %486 = vmatpush1.bf16.msra.mxu0 %v421
    %487 = vmatprep.subr.bf16.mxu0 %v424
    %488 = vmatpush1.bf16.msra.mxu0 %v423
    %489 = vmatprep.subr.bf16.mxu0 %v426
    %490 = vmatpush1.bf16.msra.mxu0 %v425
    %491 = vmatprep.subr.bf16.mxu0 %v428
    %492 = vmatpush1.bf16.msra.mxu0 %v427
    %493 = vmatprep.subr.bf16.mxu0 %v430
    %494 = vmatpush1.bf16.msra.mxu0 %v429
    %495 = vmatprep.subr.bf16.mxu0 %v432
    %496 = vmatpush1.bf16.msra.mxu0 %v431
    %497 = vmatprep.subr.bf16.mxu0 %v434
    %498 = vmatpush1.bf16.msra.mxu0 %v433
    %499 = vmatprep.subr.bf16.mxu0 %v436
    %500 = vmatpush1.bf16.msra.mxu0 %v435
    %501 = vmatprep.subr.bf16.mxu0 %v438
    %502 = vmatpush1.bf16.msra.mxu0 %v437
    %503 = vmatprep.mubr.bf16.mxu0 %v266
    %504 = vmatmul.mubr.bf16.gmra.mrb[0].mxu0 %v265
    %v505 = vpop.f32.mrb[0].mxu0
    %v506 = vadd.f32 %v304, %v505
    %v507 = vpop.f32.mrb[0].mxu0
    %v508 = vadd.f32 %v308, %v507
    %v509 = vpop.f32.mrb[0].mxu0
    %v510 = vadd.f32 %v304, %v509
    %v511 = vpop.f32.mrb[0].mxu0
    %v512 = vadd.f32 %v308, %v511
    %513 = vdwg.mxu0
    %v514 = vmax.f32 %v506, 0.0
    %v515 = vmax.f32 %v508, 0.0
    %v516 = vmax.f32 %v510, 0.0
    %v517 = vmax.f32 %v512, 0.0
    %v518 = vpack.c.bf16 %v516, %v514
    %v519 = vpack.c.bf16 %v517, %v515
    %v520 = vld [vmem:[#allocation8] sm:$0xf]
    %v521 = vld [vmem:[#allocation8 + $0x4] sm:$0xf]
    %v522 = vld [vmem:[#allocation8 + $0x8] sm:$0xf]
    %v523 = vld [vmem:[#allocation8 + $0xc] sm:$0xf]
    %v524 = vld [vmem:[#allocation8 + $0x10] sm:$0xf]
    %v525 = vld [vmem:[#allocation8 + $0x14] sm:$0xf]
    %v526 = vld [vmem:[#allocation8 + $0x18] sm:$0xf]
    %v527 = vld [vmem:[#allocation8 + $0x1c] sm:$0xf]
    %v528 = vld [vmem:[#allocation8 + $0x20] sm:$0xf]
    %v529 = vld [vmem:[#allocation8 + $0x24] sm:$0xf]
    %v530 = vld [vmem:[#allocation8 + $0x28] sm:$0xf]
    %v531 = vld [vmem:[#allocation8 + $0x2c] sm:$0xf]
    %v532 = vld [vmem:[#allocation8 + $0x30] sm:$0xf]
    %v533 = vld [vmem:[#allocation8 + $0x34] sm:$0xf]
    %v534 = vld [vmem:[#allocation8 + $0x38] sm:$0xf]
    %v535 = vld [vmem:[#allocation8 + $0x3c] sm:$0xf]
    %v536 = vld [vmem:[#allocation8 + $0x40] sm:$0xf]
    %v537 = vld [vmem:[#allocation8 + $0x44] sm:$0xf]
    %v538 = vld [vmem:[#allocation8 + $0x48] sm:$0xf]
    %v539 = vld [vmem:[#allocation8 + $0x4c] sm:$0xf]
    %v540 = vld [vmem:[#allocation8 + $0x50] sm:$0xf]
    %v541 = vld [vmem:[#allocation8 + $0x54] sm:$0xf]
    %v542 = vld [vmem:[#allocation8 + $0x58] sm:$0xf]
    %v543 = vld [vmem:[#allocation8 + $0x5c] sm:$0xf]
    %v544 = vld [vmem:[#allocation8 + $0x60] sm:$0xf]
    %v545 = vld [vmem:[#allocation8 + $0x64] sm:$0xf]
    %v546 = vld [vmem:[#allocation8 + $0x68] sm:$0xf]
    %v547 = vld [vmem:[#allocation8 + $0x6c] sm:$0xf]
    %v548 = vld [vmem:[#allocation8 + $0x70] sm:$0xf]
    %v549 = vld [vmem:[#allocation8 + $0x74] sm:$0xf]
    %v550 = vld [vmem:[#allocation8 + $0x78] sm:$0xf]
    %v551 = vld [vmem:[#allocation8 + $0x7c] sm:$0xf]
    %v552 = vld [vmem:[%s6] sm:$0x1]
    %v554 = vlaneseq
    %v555 = vshrl.u32 %v554, 7
    %v556 = vsub.s32 0, %v555
    %v557 = vrot.slane %v552, %v556
    %v591 = vunpack.c.l.b16 %v520
    %v592 = vunpack.c.l.b16 %v521
    %v593 = vunpack.c.l.b16 %v522
    %v594 = vunpack.c.l.b16 %v523
    %v595 = vunpack.c.l.b16 %v524
    %v596 = vunpack.c.l.b16 %v525
    %v597 = vunpack.c.l.b16 %v526
    %v598 = vunpack.c.l.b16 %v527
    %v599 = vunpack.c.l.b16 %v528
    %v600 = vunpack.c.l.b16 %v529
    %v601 = vunpack.c.l.b16 %v530
    %v602 = vunpack.c.l.b16 %v531
    %v603 = vunpack.c.l.b16 %v532
    %v604 = vunpack.c.l.b16 %v533
    %v605 = vunpack.c.l.b16 %v534
    %v606 = vunpack.c.l.b16 %v535
    %v607 = vunpack.c.l.b16 %v536
    %v608 = vunpack.c.l.b16 %v537
    %v609 = vunpack.c.l.b16 %v538
    %v610 = vunpack.c.l.b16 %v539
    %v611 = vunpack.c.l.b16 %v540
    %v612 = vunpack.c.l.b16 %v541
    %v613 = vunpack.c.l.b16 %v542
    %v614 = vunpack.c.l.b16 %v543
    %v615 = vunpack.c.l.b16 %v544
    %v616 = vunpack.c.l.b16 %v545
    %v617 = vunpack.c.l.b16 %v546
    %v618 = vunpack.c.l.b16 %v547
    %v619 = vunpack.c.l.b16 %v548
    %v620 = vunpack.c.l.b16 %v549
    %v621 = vunpack.c.l.b16 %v550
    %v622 = vunpack.c.l.b16 %v551
    %v623 = vpack.c.b16 %v592, %v591
    %v624 = vpack.c.b16 %v594, %v593
    %v625 = vpack.c.b16 %v596, %v595
    %v626 = vpack.c.b16 %v598, %v597
    %v627 = vpack.c.b16 %v600, %v599
    %v628 = vpack.c.b16 %v602, %v601
    %v629 = vpack.c.b16 %v604, %v603
    %v630 = vpack.c.b16 %v606, %v605
    %v631 = vpack.c.b16 %v608, %v607
    %v632 = vpack.c.b16 %v610, %v609
    %v633 = vpack.c.b16 %v612, %v611
    %v634 = vpack.c.b16 %v614, %v613
    %v635 = vpack.c.b16 %v616, %v615
    %v636 = vpack.c.b16 %v618, %v617
    %v637 = vpack.c.b16 %v620, %v619
    %v638 = vpack.c.b16 %v622, %v621
    %655 = vmatprep.subr.bf16.mxu0 0
    %656 = vmatpush1.bf16.msra.mxu0 %v623
    %657 = vmatprep.subr.bf16.mxu0 0
    %658 = vmatpush1.bf16.msra.mxu0 %v624
    %659 = vmatprep.subr.bf16.mxu0 0
    %660 = vmatpush1.bf16.msra.mxu0 %v625
    %661 = vmatprep.subr.bf16.mxu0 0
    %662 = vmatpush1.bf16.msra.mxu0 %v626
    %663 = vmatprep.subr.bf16.mxu0 0
    %664 = vmatpush1.bf16.msra.mxu0 %v627
    %665 = vmatprep.subr.bf16.mxu0 0
    %666 = vmatpush1.bf16.msra.mxu0 %v628
    %667 = vmatprep.subr.bf16.mxu0 0
    %668 = vmatpush1.bf16.msra.mxu0 %v629
    %669 = vmatprep.subr.bf16.mxu0 0
    %670 = vmatpush1.bf16.msra.mxu0 %v630
    %671 = vmatprep.subr.bf16.mxu0 0
    %672 = vmatpush1.bf16.msra.mxu0 %v631
    %673 = vmatprep.subr.bf16.mxu0 0
    %674 = vmatpush1.bf16.msra.mxu0 %v632
    %675 = vmatprep.subr.bf16.mxu0 0
    %676 = vmatpush1.bf16.msra.mxu0 %v633
    %677 = vmatprep.subr.bf16.mxu0 0
    %678 = vmatpush1.bf16.msra.mxu0 %v634
    %679 = vmatprep.subr.bf16.mxu0 0
    %680 = vmatpush1.bf16.msra.mxu0 %v635
    %681 = vmatprep.subr.bf16.mxu0 0
    %682 = vmatpush1.bf16.msra.mxu0 %v636
    %683 = vmatprep.subr.bf16.mxu0 0
    %684 = vmatpush1.bf16.msra.mxu0 %v637
    %685 = vmatprep.subr.bf16.mxu0 0
    %686 = vmatpush1.bf16.msra.mxu0 %v638
    %687 = vmatprep.mubr.bf16.mxu0 %v519
    %688 = vmatmul.mubr.bf16.gmra.mrb[0].mxu0 %v518
    %v689 = vpop.f32.mrb[0].mxu0
    %v690 = vadd.f32 %v557, %v689
    %v691 = vpop.f32.mrb[0].mxu0
    %v692 = vpop.f32.mrb[0].mxu0
    %v693 = vadd.f32 %v557, %v692
    %v694 = vpop.f32.mrb[0].mxu0
    %695 = vdwg.mxu0
    %v696 = vmax.f32 %v690, 0.0
    %v697 = vmax.f32 %v693, 0.0
    %v698 = vpack.c.bf16 %v697, %v696
    %v699 = vld [vmem:[#allocation10] sm:$0xf]
    %v700 = vld [vmem:[#allocation10 + $0x4] sm:$0xf]
    %v701 = vld [vmem:[#allocation10 + $0x8] sm:$0xf]
    %v702 = vld [vmem:[#allocation10 + $0xc] sm:$0xf]
    %v703 = vld [vmem:[#allocation10 + $0x10] sm:$0xf]
    %v704 = vld [vmem:[#allocation10 + $0x14] sm:$0xf]
    %v705 = vld [vmem:[#allocation10 + $0x18] sm:$0xf]
    %v706 = vld [vmem:[#allocation10 + $0x1c] sm:$0xf]
    %v707 = vld [vmem:[#allocation10 + $0x20] sm:$0xf]
    %v708 = vld [vmem:[#allocation10 + $0x24] sm:$0xf]
    %v709 = vld [vmem:[#allocation10 + $0x28] sm:$0xf]
    %v710 = vld [vmem:[#allocation10 + $0x2c] sm:$0xf]
    %v711 = vld [vmem:[#allocation10 + $0x30] sm:$0xf]
    %v712 = vld [vmem:[#allocation10 + $0x34] sm:$0xf]
    %v713 = vld [vmem:[#allocation10 + $0x38] sm:$0xf]
    %v714 = vld [vmem:[#allocation10 + $0x3c] sm:$0xf]
    %v715 = vld [vmem:[%s8] sm:$0x1]
    %v717 = vlaneseq
    %v718 = vshrl.u32 %v717, 7
    %v719 = vsub.s32 0, %v718
    %v720 = vrot.slane %v715, %v719
    %v738 = vunpack.c.l.b16 %v699
    %v739 = vunpack.c.l.b16 %v700
    %v740 = vunpack.c.l.b16 %v701
    %v741 = vunpack.c.l.b16 %v702
    %v742 = vunpack.c.l.b16 %v703
    %v743 = vunpack.c.l.b16 %v704
    %v744 = vunpack.c.l.b16 %v705
    %v745 = vunpack.c.l.b16 %v706
    %v746 = vunpack.c.l.b16 %v707
    %v747 = vunpack.c.l.b16 %v708
    %v748 = vunpack.c.l.b16 %v709
    %v749 = vunpack.c.l.b16 %v710
    %v750 = vunpack.c.l.b16 %v711
    %v751 = vunpack.c.l.b16 %v712
    %v752 = vunpack.c.l.b16 %v713
    %v753 = vunpack.c.l.b16 %v714
    %v754 = vpack.c.b16 %v739, %v738
    %v755 = vpack.c.b16 %v741, %v740
    %v756 = vpack.c.b16 %v743, %v742
    %v757 = vpack.c.b16 %v745, %v744
    %v758 = vpack.c.b16 %v747, %v746
    %v759 = vpack.c.b16 %v749, %v748
    %v760 = vpack.c.b16 %v751, %v750
    %v761 = vpack.c.b16 %v753, %v752
    %770 = vmatprep.subr.bf16.mxu0 0
    %771 = vmatpush1.bf16.msra.mxu0 %v754
    %772 = vmatprep.subr.bf16.mxu0 0
    %773 = vmatpush1.bf16.msra.mxu0 %v755
    %774 = vmatprep.subr.bf16.mxu0 0
    %775 = vmatpush1.bf16.msra.mxu0 %v756
    %776 = vmatprep.subr.bf16.mxu0 0
    %777 = vmatpush1.bf16.msra.mxu0 %v757
    %778 = vmatprep.subr.bf16.mxu0 0
    %779 = vmatpush1.bf16.msra.mxu0 %v758
    %780 = vmatprep.subr.bf16.mxu0 0
    %781 = vmatpush1.bf16.msra.mxu0 %v759
    %782 = vmatprep.subr.bf16.mxu0 0
    %783 = vmatpush1.bf16.msra.mxu0 %v760
    %784 = vmatprep.subr.bf16.mxu0 0
    %785 = vmatpush1.bf16.msra.mxu0 %v761
    %786 = vmatprep.subr.bf16.mxu0 0
    %787 = vmatpush1.bf16.msra.mxu0 0
    %788 = vmatprep.subr.bf16.mxu0 0
    %789 = vmatpush1.bf16.msra.mxu0 0
    %790 = vmatprep.subr.bf16.mxu0 0
    %791 = vmatpush1.bf16.msra.mxu0 0
    %792 = vmatprep.subr.bf16.mxu0 0
    %793 = vmatpush1.bf16.msra.mxu0 0
    %794 = vmatprep.subr.bf16.mxu0 0
    %795 = vmatpush1.bf16.msra.mxu0 0
    %796 = vmatprep.subr.bf16.mxu0 0
    %797 = vmatpush1.bf16.msra.mxu0 0
    %798 = vmatprep.subr.bf16.mxu0 0
    %799 = vmatpush1.bf16.msra.mxu0 0
    %800 = vmatprep.subr.bf16.mxu0 0
    %801 = vmatpush1.bf16.msra.mxu0 0
    %802 = vmatprep.mubr.bf16.mxu0 0
    %803 = vmatmul.mubr.bf16.gmra.mrb[0].mxu0 %v698
    %v804 = vpop.f32.mrb[0].mxu0
    %v805 = vadd.f32 %v720, %v804
    %v806 = vpop.f32.mrb[0].mxu0
    %v807 = vpop.f32.mrb[0].mxu0
    %v808 = vadd.f32 %v720, %v807
    %v809 = vpop.f32.mrb[0].mxu0
    %810 = vdwg.mxu0
    %811 = vst [vmem:[#allocation11] sm:$0xff] %v805
    %812 = vst [vmem:[#allocation11 + $0x8] sm:$0xff] %v808
    // Predicated region
    $region58: #{tpu_custom_call.1} parent=1 // pred_check
      _
    $region59: #{tpu_custom_call.1} parent=1 // pred_check_branch
      %814 = sbr.rel (0) target = $region61
    $region60: #{tpu_custom_call.1} parent=1 // pred_region
      %s816 = ssub.s32 256, 256
      %817 = vsyncadd [#allocation4], %s816
      %s818 = sshll.u32 [#allocation11], 4
      %s819 = int_to_ptr.vmem [resolvable:$true] %s818
      %824 = dma.vmem_to_hbm [thread:$0]  %s819, 256, %s9, [#allocation4], 128, 128, 8
    $region61: #{tpu_custom_call.1} parent=1 // pred_fallthru
      _
    // Predicated region
    $region62: #{tpu_custom_call.1} parent=1 // pred_check
      _
    $region63: #{tpu_custom_call.1} parent=1 // pred_check_branch
      %826 = sbr.rel (0) target = $region65
    $region64: #{tpu_custom_call.1} parent=1 // pred_region
      %827 = dma.done [#allocation4], 256
    $region65: #{tpu_custom_call.1} parent=1 // pred_fallthru
      _
    %828 = vsyncpa [#allocation3], 1
    %829 = vsyncpa [#allocation6], 1
    %830 = vsyncpa [#allocation9], 1
    %831 = vsyncpa [#allocation4], 1

// kernel: tpu_custom_call.1
$region0: #{tpu_custom_call.1}
  #allocation0 [shape = 'u32[]', space=smem, size = 0x4, offset = 0x4, fixed_abs, tag = 'smem constant byte address 0x4 - core index']
  #allocation1 [shape = 'u32[144,128]{1,0:T(1,128)}', space=vmem, size = 0x12000, scoped, tag = 'internal scratch']
  %s0 = inlined_call_operand.hbm [shape: bf16[16,128], index: 0, kind: input, shape index: {}]
  %s1 = inlined_call_operand.hbm [shape: bf16[128,256], index: 1, kind: input, shape index: {}]
  %s2 = inlined_call_operand.vmem [shape: f32[1,256], index: 2, kind: input, shape index: {}]
  %s3 = inlined_call_operand.hbm [shape: bf16[256,256], index: 3, kind: input, shape index: {}]
  %s4 = inlined_call_operand.vmem [shape: f32[1,256], index: 4, kind: input, shape index: {}]
  %s5 = inlined_call_operand.hbm [shape: bf16[256,128], index: 5, kind: input, shape index: {}]
  %s6 = inlined_call_operand.vmem [shape: f32[1,128], index: 6, kind: input, shape index: {}]
  %s7 = inlined_call_operand.hbm [shape: bf16[128,128], index: 7, kind: input, shape index: {}]
  %s8 = inlined_call_operand.vmem [shape: f32[1,128], index: 8, kind: input, shape index: {}]
  %s9 = inlined_call_operand.hbm [shape: f32[16,128], index: 9, kind: output, shape index: {}]
  %s10 = sld [smem:[#allocation0]]
  $region66: #{tpu_custom_call.1} parent=0
    _
  %s12 = ssub.s32 1, %s10
  %s13 = scalar_select 0, %s12, %s10
  $region1: #{tpu_custom_call.1} parent=0
    #allocation2 [shape = 'u8[4096]{0}', space=vmem, size = 0x1000, scoped, tag = 'input window, operand 0, single buffered']
    #allocation3 [shape = 's32[1]{0}', space=sflag, size = 0x4, scoped, tag = 'scoped memory for tpu_custom_call.1']
    #allocation4 [shape = 's32[1]{0}', space=sflag, size = 0x4, scoped, tag = 'scoped memory for tpu_custom_call.1']
    #allocation5 [shape = 'u8[65536]{0}', space=vmem, size = 0x10000, scoped, tag = 'input window, operand 1, single buffered']
    #allocation6 [shape = 's32[1]{0}', space=sflag, size = 0x4, scoped, tag = 'scoped memory for tpu_custom_call.1']
    #allocation7 [shape = 'u8[131072]{0}', space=vmem, size = 0x20000, scoped, tag = 'input window, operand 3, single buffered']
    #allocation8 [shape = 'u8[65536]{0}', space=vmem, size = 0x10000, scoped, tag = 'input window, operand 5, single buffered']
    #allocation9 [shape = 's32[1]{0}', space=sflag, size = 0x4, scoped, tag = 'scoped memory for tpu_custom_call.1']
    #allocation10 [shape = 'u8[32768]{0}', space=vmem, size = 0x8000, scoped, tag = 'input window, operand 7, single buffered']
    #allocation11 [shape = 'u8[8192]{0}', space=vmem, size = 0x2000, scoped, tag = 'output window, operand 0, single buffered']
    %14 = vsyncpa [#allocation3], 0
    %15 = vsyncpa [#allocation6], 0
    %16 = vsyncpa [#allocation9], 0
    %17 = vsyncpa [#allocation4], 0
    // Predicated region
    $region2: #{tpu_custom_call.1} parent=1 // pred_check
      _
    $region3: #{tpu_custom_call.1} parent=1 // pred_check_branch
      %19 = sbr.rel (0) target = $region5
    $region4: #{tpu_custom_call.1} parent=1 // pred_region
      %s21 = ssub.s32 128, 128
      %22 = vsyncadd [#allocation3], %s21
      %s23 = sshll.u32 [#allocation2], 4
      %s24 = int_to_ptr.vmem [resolvable:$true] %s23
      %29 = dma.hbm_to_vmem [thread:$0]  %s0, 128, %s24, [#allocation3], 64, 64, 4
    $region5: #{tpu_custom_call.1} parent=1 // pred_fallthru
      _
    // Predicated region
    $region6: #{tpu_custom_call.1} parent=1 // pred_check
      _
    $region7: #{tpu_custom_call.1} parent=1 // pred_check_branch
      %31 = sbr.rel (0) target = $region9
    $region8: #{tpu_custom_call.1} parent=1 // pred_region
      %s33 = ssub.s32 2048, 2048
      %34 = vsyncadd [#allocation6], %s33
      %s35 = sshll.u32 [#allocation5], 4
      %s36 = int_to_ptr.vmem [resolvable:$true] %s35
      %41 = dma.hbm_to_vmem [thread:$0]  %s1, 2048, %s36, [#allocation6], 128, 128, 8
    $region9: #{tpu_custom_call.1} parent=1 // pred_fallthru
      _
    // Predicated region
    $region10: #{tpu_custom_call.1} parent=1 // pred_check
      _
    $region11: #{tpu_custom_call.1} parent=1 // pred_check_branch
      %43 = sbr.rel (0) target = $region13
    $region12: #{tpu_custom_call.1} parent=1 // pred_region
      _
    $region13: #{tpu_custom_call.1} parent=1 // pred_fallthru
      _
    // Predicated region
    $region14: #{tpu_custom_call.1} parent=1 // pred_check
      _
    $region15: #{tpu_custom_call.1} parent=1 // pred_check_branch
      %45 = sbr.rel (0) target = $region17
    $region16: #{tpu_custom_call.1} parent=1 // pred_region
      %s47 = ssub.s32 4096, 4096
      %48 = vsyncadd [#allocation6], %s47
      %s49 = sshll.u32 [#allocation7], 4
      %s50 = int_to_ptr.vmem [resolvable:$true] %s49
      %55 = dma.hbm_to_vmem [thread:$0]  %s3, 4096, %s50, [#allocation6], 128, 128, 8
    $region17: #{tpu_custom_call.1} parent=1 // pred_fallthru
      _
    // Predicated region
    $region18: #{tpu_custom_call.1} parent=1 // pred_check
      _
    $region19: #{tpu_custom_call.1} parent=1 // pred_check_branch
      %57 = sbr.rel (0) target = $region21
    $region20: #{tpu_custom_call.1} parent=1 // pred_region
      _
    $region21: #{tpu_custom_call.1} parent=1 // pred_fallthru
      _
    // Predicated region
    $region22: #{tpu_custom_call.1} parent=1 // pred_check
      _
    $region23: #{tpu_custom_call.1} parent=1 // pred_check_branch
      %59 = sbr.rel (0) target = $region25
    $region24: #{tpu_custom_call.1} parent=1 // pred_region
      %s61 = ssub.s32 2048, 2048
      %62 = vsyncadd [#allocation9], %s61
      %s63 = sshll.u32 [#allocation8], 4
      %s64 = int_to_ptr.vmem [resolvable:$true] %s63
      %69 = dma.hbm_to_vmem [thread:$0]  %s5, 2048, %s64, [#allocation9], 64, 64, 4
    $region25: #{tpu_custom_call.1} parent=1 // pred_fallthru
      _
    // Predicated region
    $region26: #{tpu_custom_call.1} parent=1 // pred_check
      _
    $region27: #{tpu_custom_call.1} parent=1 // pred_check_branch
      %71 = sbr.rel (0) target = $region29
    $region28: #{tpu_custom_call.1} parent=1 // pred_region
      _
    $region29: #{tpu_custom_call.1} parent=1 // pred_fallthru
      _
    // Predicated region
    $region30: #{tpu_custom_call.1} parent=1 // pred_check
      _
    $region31: #{tpu_custom_call.1} parent=1 // pred_check_branch
      %73 = sbr.rel (0) target = $region33
    $region32: #{tpu_custom_call.1} parent=1 // pred_region
      %s75 = ssub.s32 1024, 1024
      %76 = vsyncadd [#allocation9], %s75
      %s77 = sshll.u32 [#allocation10], 4
      %s78 = int_to_ptr.vmem [resolvable:$true] %s77
      %83 = dma.hbm_to_vmem [thread:$0]  %s7, 1024, %s78, [#allocation9], 64, 64, 4
    $region33: #{tpu_custom_call.1} parent=1 // pred_fallthru
      _
    // Predicated region
    $region34: #{tpu_custom_call.1} parent=1 // pred_check
      _
    $region35: #{tpu_custom_call.1} parent=1 // pred_check_branch
      %85 = sbr.rel (0) target = $region37
    $region36: #{tpu_custom_call.1} parent=1 // pred_region
      _
    $region37: #{tpu_custom_call.1} parent=1 // pred_fallthru
      _
    // Predicated region
    $region38: #{tpu_custom_call.1} parent=1 // pred_check
      _
    $region39: #{tpu_custom_call.1} parent=1 // pred_check_branch
      %87 = sbr.rel (0) target = $region41
    $region40: #{tpu_custom_call.1} parent=1 // pred_region
      %88 = dma.done [#allocation3], 128
    $region41: #{tpu_custom_call.1} parent=1 // pred_fallthru
      _
    // Predicated region
    $region42: #{tpu_custom_call.1} parent=1 // pred_check
      _
    $region43: #{tpu_custom_call.1} parent=1 // pred_check_branch
      %90 = sbr.rel (0) target = $region45
    $region44: #{tpu_custom_call.1} parent=1 // pred_region
      %91 = dma.done [#allocation6], 2048
    $region45: #{tpu_custom_call.1} parent=1 // pred_fallthru
      _
    // Predicated region
    $region46: #{tpu_custom_call.1} parent=1 // pred_check
      _
    $region47: #{tpu_custom_call.1} parent=1 // pred_check_branch
      %93 = sbr.rel (0) target = $region49
    $region48: #{tpu_custom_call.1} parent=1 // pred_region
      %94 = dma.done [#allocation6], 4096
    $region49: #{tpu_custom_call.1} parent=1 // pred_fallthru
      _
    // Predicated region
    $region50: #{tpu_custom_call.1} parent=1 // pred_check
      _
    $region51: #{tpu_custom_call.1} parent=1 // pred_check_branch
      %96 = sbr.rel (0) target = $region53
    $region52: #{tpu_custom_call.1} parent=1 // pred_region
      %97 = dma.done [#allocation9], 2048
    $region53: #{tpu_custom_call.1} parent=1 // pred_fallthru
      _
    // Predicated region
    $region54: #{tpu_custom_call.1} parent=1 // pred_check
      _
    $region55: #{tpu_custom_call.1} parent=1 // pred_check_branch
      %99 = sbr.rel (0) target = $region57
    $region56: #{tpu_custom_call.1} parent=1 // pred_region
      %100 = dma.done [#allocation9], 1024
    $region57: #{tpu_custom_call.1} parent=1 // pred_fallthru
      _
    %v102 = vld [vmem:[#allocation2] sm:$0xf]
    %v103 = vld [vmem:[#allocation2 + $0x4] sm:$0xf]
    %v104 = vld [vmem:[#allocation5] sm:$0xff]
    %v105 = vld [vmem:[#allocation5 + $0x8] sm:$0xff]
    %v106 = vld [vmem:[#allocation5 + $0x10] sm:$0xff]
    %v107 = vld [vmem:[#allocation5 + $0x18] sm:$0xff]
    %v108 = vld [vmem:[#allocation5 + $0x20] sm:$0xff]
    %v109 = vld [vmem:[#allocation5 + $0x28] sm:$0xff]
    %v110 = vld [vmem:[#allocation5 + $0x30] sm:$0xff]
    %v111 = vld [vmem:[#allocation5 + $0x38] sm:$0xff]
    %v112 = vld [vmem:[#allocation5 + $0x40] sm:$0xff]
    %v113 = vld [vmem:[#allocation5 + $0x48] sm:$0xff]
    %v114 = vld [vmem:[#allocation5 + $0x50] sm:$0xff]
    %v115 = vld [vmem:[#allocation5 + $0x58] sm:$0xff]
    %v116 = vld [vmem:[#allocation5 + $0x60] sm:$0xff]
    %v117 = vld [vmem:[#allocation5 + $0x68] sm:$0xff]
    %v118 = vld [vmem:[#allocation5 + $0x70] sm:$0xff]
    %v119 = vld [vmem:[#allocation5 + $0x78] sm:$0xff]
    %v120 = vld [vmem:[%s2] sm:$0x3]
    %v122 = vlaneseq
    %v123 = vshrl.u32 %v122, 7
    %v124 = vsub.s32 0, %v123
    %v125 = vrot.slane %v120, %v124
    %v126 = vlaneseq
    %v127 = vshrl.u32 %v126, 7
    %v128 = vsub.s32 1, %v127
    %v129 = vrot.slane %v120, %v128
    %v134 = vunpack.c.l.b16 %v102
    %v135 = vunpack.c.l.b16 %v103
    %v136 = vpack.c.b16 %v135, %v134
    %v154 = vunpack.c.l.b16 %v104
    %v155 = vunpack.c.h.b16 %v104
    %v156 = vunpack.c.l.b16 %v105
    %v157 = vunpack.c.h.b16 %v105
    %v158 = vunpack.c.l.b16 %v106
    %v159 = vunpack.c.h.b16 %v106
    %v160 = vunpack.c.l.b16 %v107
    %v161 = vunpack.c.h.b16 %v107
    %v162 = vunpack.c.l.b16 %v108
    %v163 = vunpack.c.h.b16 %v108
    %v164 = vunpack.c.l.b16 %v109
    %v165 = vunpack.c.h.b16 %v109
    %v166 = vunpack.c.l.b16 %v110
    %v167 = vunpack.c.h.b16 %v110
    %v168 = vunpack.c.l.b16 %v111
    %v169 = vunpack.c.h.b16 %v111
    %v170 = vunpack.c.l.b16 %v112
    %v171 = vunpack.c.h.b16 %v112
    %v172 = vunpack.c.l.b16 %v113
    %v173 = vunpack.c.h.b16 %v113
    %v174 = vunpack.c.l.b16 %v114
    %v175 = vunpack.c.h.b16 %v114
    %v176 = vunpack.c.l.b16 %v115
    %v177 = vunpack.c.h.b16 %v115
    %v178 = vunpack.c.l.b16 %v116
    %v179 = vunpack.c.h.b16 %v116
    %v180 = vunpack.c.l.b16 %v117
    %v181 = vunpack.c.h.b16 %v117
    %v182 = vunpack.c.l.b16 %v118
    %v183 = vunpack.c.h.b16 %v118
    %v184 = vunpack.c.l.b16 %v119
    %v185 = vunpack.c.h.b16 %v119
    %v186 = vpack.c.b16 %v156, %v154
    %v187 = vpack.c.b16 %v157, %v155
    %v188 = vpack.c.b16 %v160, %v158
    %v189 = vpack.c.b16 %v161, %v159
    %v190 = vpack.c.b16 %v164, %v162
    %v191 = vpack.c.b16 %v165, %v163
    %v192 = vpack.c.b16 %v168, %v166
    %v193 = vpack.c.b16 %v169, %v167
    %v194 = vpack.c.b16 %v172, %v170
    %v195 = vpack.c.b16 %v173, %v171
    %v196 = vpack.c.b16 %v176, %v174
    %v197 = vpack.c.b16 %v177, %v175
    %v198 = vpack.c.b16 %v180, %v178
    %v199 = vpack.c.b16 %v181, %v179
    %v200 = vpack.c.b16 %v184, %v182
    %v201 = vpack.c.b16 %v185, %v183
    %218 = vmatprep.subr.bf16.mxu0 %v187
    %219 = vmatpush1.bf16.msra.mxu0 %v186
    %220 = vmatprep.subr.bf16.mxu0 %v189
    %221 = vmatpush1.bf16.msra.mxu0 %v188
    %222 = vmatprep.subr.bf16.mxu0 %v191
    %223 = vmatpush1.bf16.msra.mxu0 %v190
    %224 = vmatprep.subr.bf16.mxu0 %v193
    %225 = vmatpush1.bf16.msra.mxu0 %v192
    %226 = vmatprep.subr.bf16.mxu0 %v195
    %227 = vmatpush1.bf16.msra.mxu0 %v194
    %228 = vmatprep.subr.bf16.mxu0 %v197
    %229 = vmatpush1.bf16.msra.mxu0 %v196
    %230 = vmatprep.subr.bf16.mxu0 %v199
    %231 = vmatpush1.bf16.msra.mxu0 %v198
    %232 = vmatprep.subr.bf16.mxu0 %v201
    %233 = vmatpush1.bf16.msra.mxu0 %v200
    %234 = vmatprep.subr.bf16.mxu0 0
    %235 = vmatpush1.bf16.msra.mxu0 0
    %236 = vmatprep.subr.bf16.mxu0 0
    %237 = vmatpush1.bf16.msra.mxu0 0
    %238 = vmatprep.subr.bf16.mxu0 0
    %239 = vmatpush1.bf16.msra.mxu0 0
    %240 = vmatprep.subr.bf16.mxu0 0
    %241 = vmatpush1.bf16.msra.mxu0 0
    %242 = vmatprep.subr.bf16.mxu0 0
    %243 = vmatpush1.bf16.msra.mxu0 0
    %244 = vmatprep.subr.bf16.mxu0 0
    %245 = vmatpush1.bf16.msra.mxu0 0
    %246 = vmatprep.subr.bf16.mxu0 0
    %247 = vmatpush1.bf16.msra.mxu0 0
    %248 = vmatprep.subr.bf16.mxu0 0
    %249 = vmatpush1.bf16.msra.mxu0 0
    %250 = vmatprep.mubr.bf16.mxu0 0
    %251 = vmatmul.mubr.bf16.gmra.mrb[0].mxu0 %v136
    %v252 = vpop.f32.mrb[0].mxu0
    %v253 = vadd.f32 %v125, %v252
    %v254 = vpop.f32.mrb[0].mxu0
    %v255 = vadd.f32 %v129, %v254
    %v256 = vpop.f32.mrb[0].mxu0
    %v257 = vadd.f32 %v125, %v256
    %v258 = vpop.f32.mrb[0].mxu0
    %v259 = vadd.f32 %v129, %v258
    %260 = vdwg.mxu0
    %v261 = vmax.f32 %v253, 0.0
    %v262 = vmax.f32 %v255, 0.0
    %v263 = vmax.f32 %v257, 0.0
    %v264 = vmax.f32 %v259, 0.0
    %v265 = vpack.c.bf16 %v263, %v261
    %v266 = vpack.c.bf16 %v264, %v262
    %v267 = vld [vmem:[#allocation7] sm:$0xff]
    %v268 = vld [vmem:[#allocation7 + $0x8] sm:$0xff]
    %v269 = vld [vmem:[#allocation7 + $0x10] sm:$0xff]
    %v270 = vld [vmem:[#allocation7 + $0x18] sm:$0xff]
    %v271 = vld [vmem:[#allocation7 + $0x20] sm:$0xff]
    %v272 = vld [vmem:[#allocation7 + $0x28] sm:$0xff]
    %v273 = vld [vmem:[#allocation7 + $0x30] sm:$0xff]
    %v274 = vld [vmem:[#allocation7 + $0x38] sm:$0xff]
    %v275 = vld [vmem:[#allocation7 + $0x40] sm:$0xff]
    %v276 = vld [vmem:[#allocation7 + $0x48] sm:$0xff]
    %v277 = vld [vmem:[#allocation7 + $0x50] sm:$0xff]
    %v278 = vld [vmem:[#allocation7 + $0x58] sm:$0xff]
    %v279 = vld [vmem:[#allocation7 + $0x60] sm:$0xff]
    %v280 = vld [vmem:[#allocation7 + $0x68] sm:$0xff]
    %v281 = vld [vmem:[#allocation7 + $0x70] sm:$0xff]
    %v282 = vld [vmem:[#allocation7 + $0x78] sm:$0xff]
    %v283 = vld [vmem:[#allocation7 + $0x80] sm:$0xff]
    %v284 = vld [vmem:[#allocation7 + $0x88] sm:$0xff]
    %v285 = vld [vmem:[#allocation7 + $0x90] sm:$0xff]
    %v286 = vld [vmem:[#allocation7 + $0x98] sm:$0xff]
    %v287 = vld [vmem:[#allocation7 + $0xa0] sm:$0xff]
    %v288 = vld [vmem:[#allocation7 + $0xa8] sm:$0xff]
    %v289 = vld [vmem:[#allocation7 + $0xb0] sm:$0xff]
    %v290 = vld [vmem:[#allocation7 + $0xb8] sm:$0xff]
    %v291 = vld [vmem:[#allocation7 + $0xc0] sm:$0xff]
    %v292 = vld [vmem:[#allocation7 + $0xc8] sm:$0xff]
    %v293 = vld [vmem:[#allocation7 + $0xd0] sm:$0xff]
    %v294 = vld [vmem:[#allocation7 + $0xd8] sm:$0xff]
    %v295 = vld [vmem:[#allocation7 + $0xe0] sm:$0xff]
    %v296 = vld [vmem:[#allocation7 + $0xe8] sm:$0xff]
    %v297 = vld [vmem:[#allocation7 + $0xf0] sm:$0xff]
    %v298 = vld [vmem:[#allocation7 + $0xf8] sm:$0xff]
    %v299 = vld [vmem:[%s4] sm:$0x3]
    %v301 = vlaneseq
    %v302 = vshrl.u32 %v301, 7
    %v303 = vsub.s32 0, %v302
    %v304 = vrot.slane %v299, %v303
    %v305 = vlaneseq
    %v306 = vshrl.u32 %v305, 7
    %v307 = vsub.s32 1, %v306
    %v308 = vrot.slane %v299, %v307
    %v343 = vunpack.c.l.b16 %v267
    %v344 = vunpack.c.h.b16 %v267
    %v345 = vunpack.c.l.b16 %v268
    %v346 = vunpack.c.h.b16 %v268
    %v347 = vunpack.c.l.b16 %v269
    %v348 = vunpack.c.h.b16 %v269
    %v349 = vunpack.c.l.b16 %v270
    %v350 = vunpack.c.h.b16 %v270
    %v351 = vunpack.c.l.b16 %v271
    %v352 = vunpack.c.h.b16 %v271
    %v353 = vunpack.c.l.b16 %v272
    %v354 = vunpack.c.h.b16 %v272
    %v355 = vunpack.c.l.b16 %v273
    %v356 = vunpack.c.h.b16 %v273
    %v357 = vunpack.c.l.b16 %v274
    %v358 = vunpack.c.h.b16 %v274
    %v359 = vunpack.c.l.b16 %v275
    %v360 = vunpack.c.h.b16 %v275
    %v361 = vunpack.c.l.b16 %v276
    %v362 = vunpack.c.h.b16 %v276
    %v363 = vunpack.c.l.b16 %v277
    %v364 = vunpack.c.h.b16 %v277
    %v365 = vunpack.c.l.b16 %v278
    %v366 = vunpack.c.h.b16 %v278
    %v367 = vunpack.c.l.b16 %v279
    %v368 = vunpack.c.h.b16 %v279
    %v369 = vunpack.c.l.b16 %v280
    %v370 = vunpack.c.h.b16 %v280
    %v371 = vunpack.c.l.b16 %v281
    %v372 = vunpack.c.h.b16 %v281
    %v373 = vunpack.c.l.b16 %v282
    %v374 = vunpack.c.h.b16 %v282
    %v375 = vunpack.c.l.b16 %v283
    %v376 = vunpack.c.h.b16 %v283
    %v377 = vunpack.c.l.b16 %v284
    %v378 = vunpack.c.h.b16 %v284
    %v379 = vunpack.c.l.b16 %v285
    %v380 = vunpack.c.h.b16 %v285
    %v381 = vunpack.c.l.b16 %v286
    %v382 = vunpack.c.h.b16 %v286
    %v383 = vunpack.c.l.b16 %v287
    %v384 = vunpack.c.h.b16 %v287
    %v385 = vunpack.c.l.b16 %v288
    %v386 = vunpack.c.h.b16 %v288
    %v387 = vunpack.c.l.b16 %v289
    %v388 = vunpack.c.h.b16 %v289
    %v389 = vunpack.c.l.b16 %v290
    %v390 = vunpack.c.h.b16 %v290
    %v391 = vunpack.c.l.b16 %v291
    %v392 = vunpack.c.h.b16 %v291
    %v393 = vunpack.c.l.b16 %v292
    %v394 = vunpack.c.h.b16 %v292
    %v395 = vunpack.c.l.b16 %v293
    %v396 = vunpack.c.h.b16 %v293
    %v397 = vunpack.c.l.b16 %v294
    %v398 = vunpack.c.h.b16 %v294
    %v399 = vunpack.c.l.b16 %v295
    %v400 = vunpack.c.h.b16 %v295
    %v401 = vunpack.c.l.b16 %v296
    %v402 = vunpack.c.h.b16 %v296
    %v403 = vunpack.c.l.b16 %v297
    %v404 = vunpack.c.h.b16 %v297
    %v405 = vunpack.c.l.b16 %v298
    %v406 = vunpack.c.h.b16 %v298
    %v407 = vpack.c.b16 %v345, %v343
    %v408 = vpack.c.b16 %v346, %v344
    %v409 = vpack.c.b16 %v349, %v347
    %v410 = vpack.c.b16 %v350, %v348
    %v411 = vpack.c.b16 %v353, %v351
    %v412 = vpack.c.b16 %v354, %v352
    %v413 = vpack.c.b16 %v357, %v355
    %v414 = vpack.c.b16 %v358, %v356
    %v415 = vpack.c.b16 %v361, %v359
    %v416 = vpack.c.b16 %v362, %v360
    %v417 = vpack.c.b16 %v365, %v363
    %v418 = vpack.c.b16 %v366, %v364
    %v419 = vpack.c.b16 %v369, %v367
    %v420 = vpack.c.b16 %v370, %v368
    %v421 = vpack.c.b16 %v373, %v371
    %v422 = vpack.c.b16 %v374, %v372
    %v423 = vpack.c.b16 %v377, %v375
    %v424 = vpack.c.b16 %v378, %v376
    %v425 = vpack.c.b16 %v381, %v379
    %v426 = vpack.c.b16 %v382, %v380
    %v427 = vpack.c.b16 %v385, %v383
    %v428 = vpack.c.b16 %v386, %v384
    %v429 = vpack.c.b16 %v389, %v387
    %v430 = vpack.c.b16 %v390, %v388
    %v431 = vpack.c.b16 %v393, %v391
    %v432 = vpack.c.b16 %v394, %v392
    %v433 = vpack.c.b16 %v397, %v395
    %v434 = vpack.c.b16 %v398, %v396
    %v435 = vpack.c.b16 %v401, %v399
    %v436 = vpack.c.b16 %v402, %v400
    %v437 = vpack.c.b16 %v405, %v403
    %v438 = vpack.c.b16 %v406, %v404
    %471 = vmatprep.subr.bf16.mxu0 %v408
    %472 = vmatpush1.bf16.msra.mxu0 %v407
    %473 = vmatprep.subr.bf16.mxu0 %v410
    %474 = vmatpush1.bf16.msra.mxu0 %v409
    %475 = vmatprep.subr.bf16.mxu0 %v412
    %476 = vmatpush1.bf16.msra.mxu0 %v411
    %477 = vmatprep.subr.bf16.mxu0 %v414
    %478 = vmatpush1.bf16.msra.mxu0 %v413
    %479 = vmatprep.subr.bf16.mxu0 %v416
    %480 = vmatpush1.bf16.msra.mxu0 %v415
    %481 = vmatprep.subr.bf16.mxu0 %v418
    %482 = vmatpush1.bf16.msra.mxu0 %v417
    %483 = vmatprep.subr.bf16.mxu0 %v420
    %484 = vmatpush1.bf16.msra.mxu0 %v419
    %485 = vmatprep.subr.bf16.mxu0 %v422
    %486 = vmatpush1.bf16.msra.mxu0 %v421
    %487 = vmatprep.subr.bf16.mxu0 %v424
    %488 = vmatpush1.bf16.msra.mxu0 %v423
    %489 = vmatprep.subr.bf16.mxu0 %v426
    %490 = vmatpush1.bf16.msra.mxu0 %v425
    %491 = vmatprep.subr.bf16.mxu0 %v428
    %492 = vmatpush1.bf16.msra.mxu0 %v427
    %493 = vmatprep.subr.bf16.mxu0 %v430
    %494 = vmatpush1.bf16.msra.mxu0 %v429
    %495 = vmatprep.subr.bf16.mxu0 %v432
    %496 = vmatpush1.bf16.msra.mxu0 %v431
    %497 = vmatprep.subr.bf16.mxu0 %v434
    %498 = vmatpush1.bf16.msra.mxu0 %v433
    %499 = vmatprep.subr.bf16.mxu0 %v436
    %500 = vmatpush1.bf16.msra.mxu0 %v435
    %501 = vmatprep.subr.bf16.mxu0 %v438
    %502 = vmatpush1.bf16.msra.mxu0 %v437
    %503 = vmatprep.mubr.bf16.mxu0 %v266
    %504 = vmatmul.mubr.bf16.gmra.mrb[0].mxu0 %v265
    %v505 = vpop.f32.mrb[0].mxu0
    %v506 = vadd.f32 %v304, %v505
    %v507 = vpop.f32.mrb[0].mxu0
    %v508 = vadd.f32 %v308, %v507
    %v509 = vpop.f32.mrb[0].mxu0
    %v510 = vadd.f32 %v304, %v509
    %v511 = vpop.f32.mrb[0].mxu0
    %v512 = vadd.f32 %v308, %v511
    %513 = vdwg.mxu0
    %v514 = vmax.f32 %v506, 0.0
    %v515 = vmax.f32 %v508, 0.0
    %v516 = vmax.f32 %v510, 0.0
    %v517 = vmax.f32 %v512, 0.0
    %v518 = vpack.c.bf16 %v516, %v514
    %v519 = vpack.c.bf16 %v517, %v515
    %v520 = vld [vmem:[#allocation8] sm:$0xf]
    %v521 = vld [vmem:[#allocation8 + $0x4] sm:$0xf]
    %v522 = vld [vmem:[#allocation8 + $0x8] sm:$0xf]
    %v523 = vld [vmem:[#allocation8 + $0xc] sm:$0xf]
    %v524 = vld [vmem:[#allocation8 + $0x10] sm:$0xf]
    %v525 = vld [vmem:[#allocation8 + $0x14] sm:$0xf]
    %v526 = vld [vmem:[#allocation8 + $0x18] sm:$0xf]
    %v527 = vld [vmem:[#allocation8 + $0x1c] sm:$0xf]
    %v528 = vld [vmem:[#allocation8 + $0x20] sm:$0xf]
    %v529 = vld [vmem:[#allocation8 + $0x24] sm:$0xf]
    %v530 = vld [vmem:[#allocation8 + $0x28] sm:$0xf]
    %v531 = vld [vmem:[#allocation8 + $0x2c] sm:$0xf]
    %v532 = vld [vmem:[#allocation8 + $0x30] sm:$0xf]
    %v533 = vld [vmem:[#allocation8 + $0x34] sm:$0xf]
    %v534 = vld [vmem:[#allocation8 + $0x38] sm:$0xf]
    %v535 = vld [vmem:[#allocation8 + $0x3c] sm:$0xf]
    %v536 = vld [vmem:[#allocation8 + $0x40] sm:$0xf]
    %v537 = vld [vmem:[#allocation8 + $0x44] sm:$0xf]
    %v538 = vld [vmem:[#allocation8 + $0x48] sm:$0xf]
    %v539 = vld [vmem:[#allocation8 + $0x4c] sm:$0xf]
    %v540 = vld [vmem:[#allocation8 + $0x50] sm:$0xf]
    %v541 = vld [vmem:[#allocation8 + $0x54] sm:$0xf]
    %v542 = vld [vmem:[#allocation8 + $0x58] sm:$0xf]
    %v543 = vld [vmem:[#allocation8 + $0x5c] sm:$0xf]
    %v544 = vld [vmem:[#allocation8 + $0x60] sm:$0xf]
    %v545 = vld [vmem:[#allocation8 + $0x64] sm:$0xf]
    %v546 = vld [vmem:[#allocation8 + $0x68] sm:$0xf]
    %v547 = vld [vmem:[#allocation8 + $0x6c] sm:$0xf]
    %v548 = vld [vmem:[#allocation8 + $0x70] sm:$0xf]
    %v549 = vld [vmem:[#allocation8 + $0x74] sm:$0xf]
    %v550 = vld [vmem:[#allocation8 + $0x78] sm:$0xf]
    %v551 = vld [vmem:[#allocation8 + $0x7c] sm:$0xf]
    %v552 = vld [vmem:[%s6] sm:$0x1]
    %v554 = vlaneseq
    %v555 = vshrl.u32 %v554, 7
    %v556 = vsub.s32 0, %v555
    %v557 = vrot.slane %v552, %v556
    %v591 = vunpack.c.l.b16 %v520
    %v592 = vunpack.c.l.b16 %v521
    %v593 = vunpack.c.l.b16 %v522
    %v594 = vunpack.c.l.b16 %v523
    %v595 = vunpack.c.l.b16 %v524
    %v596 = vunpack.c.l.b16 %v525
    %v597 = vunpack.c.l.b16 %v526
    %v598 = vunpack.c.l.b16 %v527
    %v599 = vunpack.c.l.b16 %v528
    %v600 = vunpack.c.l.b16 %v529
    %v601 = vunpack.c.l.b16 %v530
    %v602 = vunpack.c.l.b16 %v531
    %v603 = vunpack.c.l.b16 %v532
    %v604 = vunpack.c.l.b16 %v533
    %v605 = vunpack.c.l.b16 %v534
    %v606 = vunpack.c.l.b16 %v535
    %v607 = vunpack.c.l.b16 %v536
    %v608 = vunpack.c.l.b16 %v537
    %v609 = vunpack.c.l.b16 %v538
    %v610 = vunpack.c.l.b16 %v539
    %v611 = vunpack.c.l.b16 %v540
    %v612 = vunpack.c.l.b16 %v541
    %v613 = vunpack.c.l.b16 %v542
    %v614 = vunpack.c.l.b16 %v543
    %v615 = vunpack.c.l.b16 %v544
    %v616 = vunpack.c.l.b16 %v545
    %v617 = vunpack.c.l.b16 %v546
    %v618 = vunpack.c.l.b16 %v547
    %v619 = vunpack.c.l.b16 %v548
    %v620 = vunpack.c.l.b16 %v549
    %v621 = vunpack.c.l.b16 %v550
    %v622 = vunpack.c.l.b16 %v551
    %v623 = vpack.c.b16 %v592, %v591
    %v624 = vpack.c.b16 %v594, %v593
    %v625 = vpack.c.b16 %v596, %v595
    %v626 = vpack.c.b16 %v598, %v597
    %v627 = vpack.c.b16 %v600, %v599
    %v628 = vpack.c.b16 %v602, %v601
    %v629 = vpack.c.b16 %v604, %v603
    %v630 = vpack.c.b16 %v606, %v605
    %v631 = vpack.c.b16 %v608, %v607
    %v632 = vpack.c.b16 %v610, %v609
    %v633 = vpack.c.b16 %v612, %v611
    %v634 = vpack.c.b16 %v614, %v613
    %v635 = vpack.c.b16 %v616, %v615
    %v636 = vpack.c.b16 %v618, %v617
    %v637 = vpack.c.b16 %v620, %v619
    %v638 = vpack.c.b16 %v622, %v621
    %655 = vmatprep.subr.bf16.mxu0 0
    %656 = vmatpush1.bf16.msra.mxu0 %v623
    %657 = vmatprep.subr.bf16.mxu0 0
    %658 = vmatpush1.bf16.msra.mxu0 %v624
    %659 = vmatprep.subr.bf16.mxu0 0
    %660 = vmatpush1.bf16.msra.mxu0 %v625
    %661 = vmatprep.subr.bf16.mxu0 0
    %662 = vmatpush1.bf16.msra.mxu0 %v626
    %663 = vmatprep.subr.bf16.mxu0 0
    %664 = vmatpush1.bf16.msra.mxu0 %v627
    %665 = vmatprep.subr.bf16.mxu0 0
    %666 = vmatpush1.bf16.msra.mxu0 %v628
    %667 = vmatprep.subr.bf16.mxu0 0
    %668 = vmatpush1.bf16.msra.mxu0 %v629
    %669 = vmatprep.subr.bf16.mxu0 0
    %670 = vmatpush1.bf16.msra.mxu0 %v630
    %671 = vmatprep.subr.bf16.mxu0 0
    %672 = vmatpush1.bf16.msra.mxu0 %v631
    %673 = vmatprep.subr.bf16.mxu0 0
    %674 = vmatpush1.bf16.msra.mxu0 %v632
    %675 = vmatprep.subr.bf16.mxu0 0
    %676 = vmatpush1.bf16.msra.mxu0 %v633
    %677 = vmatprep.subr.bf16.mxu0 0
    %678 = vmatpush1.bf16.msra.mxu0 %v634
    %679 = vmatprep.subr.bf16.mxu0 0
    %680 = vmatpush1.bf16.msra.mxu0 %v635
    %681 = vmatprep.subr.bf16.mxu0 0
    %682 = vmatpush1.bf16.msra.mxu0 %v636
    %683 = vmatprep.subr.bf16.mxu0 0
    %684 = vmatpush1.bf16.msra.mxu0 %v637
    %685 = vmatprep.subr.bf16.mxu0 0
    %686 = vmatpush1.bf16.msra.mxu0 %v638
    %687 = vmatprep.mubr.bf16.mxu0 %v519
    %688 = vmatmul.mubr.bf16.gmra.mrb[0].mxu0 %v518
    %v689 = vpop.f32.mrb[0].mxu0
    %v690 = vadd.f32 %v557, %v689
    %v691 = vpop.f32.mrb[0].mxu0
    %v692 = vpop.f32.mrb[0].mxu0
    %v693 = vadd.f32 %v557, %v692
    %v694 = vpop.f32.mrb[0].mxu0
    %695 = vdwg.mxu0
    %v696 = vmax.f32 %v690, 0.0
    %v697 = vmax.f32 %v693, 0.0
    %v698 = vpack.c.bf16 %v697, %v696
    %v699 = vld [vmem:[#allocation10] sm:$0xf]
    %v700 = vld [vmem:[#allocation10 + $0x4] sm:$0xf]
    %v701 = vld [vmem:[#allocation10 + $0x8] sm:$0xf]
    %v702 = vld [vmem:[#allocation10 + $0xc] sm:$0xf]
    %v703 = vld [vmem:[#allocation10 + $0x10] sm:$0xf]
    %v704 = vld [vmem:[#allocation10 + $0x14] sm:$0xf]
    %v705 = vld [vmem:[#allocation10 + $0x18] sm:$0xf]
    %v706 = vld [vmem:[#allocation10 + $0x1c] sm:$0xf]
    %v707 = vld [vmem:[#allocation10 + $0x20] sm:$0xf]
    %v708 = vld [vmem:[#allocation10 + $0x24] sm:$0xf]
    %v709 = vld [vmem:[#allocation10 + $0x28] sm:$0xf]
    %v710 = vld [vmem:[#allocation10 + $0x2c] sm:$0xf]
    %v711 = vld [vmem:[#allocation10 + $0x30] sm:$0xf]
    %v712 = vld [vmem:[#allocation10 + $0x34] sm:$0xf]
    %v713 = vld [vmem:[#allocation10 + $0x38] sm:$0xf]
    %v714 = vld [vmem:[#allocation10 + $0x3c] sm:$0xf]
    %v715 = vld [vmem:[%s8] sm:$0x1]
    %v717 = vlaneseq
    %v718 = vshrl.u32 %v717, 7
    %v719 = vsub.s32 0, %v718
    %v720 = vrot.slane %v715, %v719
    %v738 = vunpack.c.l.b16 %v699
    %v739 = vunpack.c.l.b16 %v700
    %v740 = vunpack.c.l.b16 %v701
    %v741 = vunpack.c.l.b16 %v702
    %v742 = vunpack.c.l.b16 %v703
    %v743 = vunpack.c.l.b16 %v704
    %v744 = vunpack.c.l.b16 %v705
    %v745 = vunpack.c.l.b16 %v706
    %v746 = vunpack.c.l.b16 %v707
    %v747 = vunpack.c.l.b16 %v708
    %v748 = vunpack.c.l.b16 %v709
    %v749 = vunpack.c.l.b16 %v710
    %v750 = vunpack.c.l.b16 %v711
    %v751 = vunpack.c.l.b16 %v712
    %v752 = vunpack.c.l.b16 %v713
    %v753 = vunpack.c.l.b16 %v714
    %v754 = vpack.c.b16 %v739, %v738
    %v755 = vpack.c.b16 %v741, %v740
    %v756 = vpack.c.b16 %v743, %v742
    %v757 = vpack.c.b16 %v745, %v744
    %v758 = vpack.c.b16 %v747, %v746
    %v759 = vpack.c.b16 %v749, %v748
    %v760 = vpack.c.b16 %v751, %v750
    %v761 = vpack.c.b16 %v753, %v752
    %770 = vmatprep.subr.bf16.mxu0 0
    %771 = vmatpush1.bf16.msra.mxu0 %v754
    %772 = vmatprep.subr.bf16.mxu0 0
    %773 = vmatpush1.bf16.msra.mxu0 %v755
    %774 = vmatprep.subr.bf16.mxu0 0
    %775 = vmatpush1.bf16.msra.mxu0 %v756
    %776 = vmatprep.subr.bf16.mxu0 0
    %777 = vmatpush1.bf16.msra.mxu0 %v757
    %778 = vmatprep.subr.bf16.mxu0 0
    %779 = vmatpush1.bf16.msra.mxu0 %v758
    %780 = vmatprep.subr.bf16.mxu0 0
    %781 = vmatpush1.bf16.msra.mxu0 %v759
    %782 = vmatprep.subr.bf16.mxu0 0
    %783 = vmatpush1.bf16.msra.mxu0 %v760
    %784 = vmatprep.subr.bf16.mxu0 0
    %785 = vmatpush1.bf16.msra.mxu0 %v761
    %786 = vmatprep.subr.bf16.mxu0 0
    %787 = vmatpush1.bf16.msra.mxu0 0
    %788 = vmatprep.subr.bf16.mxu0 0
    %789 = vmatpush1.bf16.msra.mxu0 0
    %790 = vmatprep.subr.bf16.mxu0 0
    %791 = vmatpush1.bf16.msra.mxu0 0
    %792 = vmatprep.subr.bf16.mxu0 0
    %793 = vmatpush1.bf16.msra.mxu0 0
    %794 = vmatprep.subr.bf16.mxu0 0
    %795 = vmatpush1.bf16.msra.mxu0 0
    %796 = vmatprep.subr.bf16.mxu0 0
    %797 = vmatpush1.bf16.msra.mxu0 0
    %798 = vmatprep.subr.bf16.mxu0 0
    %799 = vmatpush1.bf16.msra.mxu0 0
    %800 = vmatprep.subr.bf16.mxu0 0
    %801 = vmatpush1.bf16.msra.mxu0 0
    %802 = vmatprep.mubr.bf16.mxu0 0
    %803 = vmatmul.mubr.bf16.gmra.mrb[0].mxu0 %v698
    %v804 = vpop.f32.mrb[0].mxu0
    %v805 = vadd.f32 %v720, %v804
    %v806 = vpop.f32.mrb[0].mxu0
    %v807 = vpop.f32.mrb[0].mxu0
    %v808 = vadd.f32 %v720, %v807
    %v809 = vpop.f32.mrb[0].mxu0
    %810 = vdwg.mxu0
    %811 = vst [vmem:[#allocation11] sm:$0xff] %v805
    %812 = vst [vmem:[#allocation11 + $0x8] sm:$0xff] %v808
    // Predicated region
    $region58: #{tpu_custom_call.1} parent=1 // pred_check
      _
    $region59: #{tpu_custom_call.1} parent=1 // pred_check_branch
      %814 = sbr.rel (0) target = $region61
    $region60: #{tpu_custom_call.1} parent=1 // pred_region
      %s816 = ssub.s32 256, 256
      %817 = vsyncadd [#allocation4], %s816
      %s818 = sshll.u32 [#allocation11], 4
      %s819 = int_to_ptr.vmem [resolvable:$true] %s818
      %824 = dma.vmem_to_hbm [thread:$0]  %s819, 256, %s9, [#allocation4], 128, 128, 8
    $region61: #{tpu_custom_call.1} parent=1 // pred_fallthru
      _
    // Predicated region
    $region62: #{tpu_custom_call.1} parent=1 // pred_check
      _
    $region63: #{tpu_custom_call.1} parent=1 // pred_check_branch
      %826 = sbr.rel (0) target = $region65
    $region64: #{tpu_custom_call.1} parent=1 // pred_region
      %827 = dma.done [#allocation4], 256
    $region65: #{tpu_custom_call.1} parent=1 // pred_fallthru
      _
    %828 = vsyncpa [#allocation3], 1
    %829 = vsyncpa [#allocation6], 1
    %830 = vsyncpa [#allocation9], 1
    %831 = vsyncpa [#allocation4], 1

</llo_original>
